<compile_context>
chip_gen: v5e
topology: v5e:2x2
jax: 0.10.0
libtpu: 0.0.40
codegen_flags: <defaults>
</compile_context>

<pallas_src>
import functools

import jax
import jax.numpy as jnp
from jax.experimental import pallas as pl
from jax.experimental.pallas import tpu as pltpu


ENC_DIM = 512   # CLIP image-embedding width
HID_DIM = 256   # classifier hidden width


def _round_up(x, m):
    return ((x + m - 1) // m) * m


# --------------------------------------------------------------------------- kernel


def clip_binary_classifier_kernel(x_ref, wenc_ref, w1_ref, b1_ref, w2_ref,
                                  b2_ref, o_ref, acc_ref, *, nk_static):
    """One (B-tile, K-tile) grid step.

    x_ref    : (TILE_B, TILE_K) bf16   flattened image tile
    wenc_ref : (TILE_K, 512)    bf16   stand-in CLIP image-encoder projection tile
    w1_ref   : (512, 256)       bf16   Linear1 weight (transposed vs. PyTorch (out,in))
    b1_ref   : (1, 256)         f32
    w2_ref   : (1, 256)         f32    Linear2 weight as a lane-dense row (PyTorch layout)
    b2_ref   : (1, 1)           f32    SMEM scalar
    o_ref    : (1, TILE_B)      f32    lane-dense sigmoid scores for this B tile
    acc_ref  : VMEM f32 accumulator for the encoder contraction (unused if nk_static == 1)
    """
    k = pl.program_id(1)

    # --- stand-in for clip_model.encode_image: tiled contraction over D_in (MXU, bf16,
    #     f32 accumulation) ---
    partial = jnp.dot(x_ref[...], wenc_ref[...],
                      preferred_element_type=jnp.float32)

    if nk_static > 1:
        # First K step initializes the accumulator with the partial product (no zero-init
        # load/store); middle steps accumulate; the LAST step does not write acc_ref at
        # all -- finalize consumes acc + partial directly (saves one f32 store+load).
        @pl.when(k == 0)
        def _init():
            acc_ref[...] = partial

        @pl.when(jnp.logical_and(k > 0, k < nk_static - 1))
        def _accum():
            acc_ref[...] += partial

    @pl.when(k == nk_static - 1)
    def _finalize():
        feat = partial if nk_static == 1 else acc_ref[...] + partial   # (TILE_B, 512) f32

        # image_features / image_features.norm(dim=1, keepdim=True)
        # (no epsilon, matching PyTorch: an all-zero row yields NaN/inf the same way;
        #  zero-padded batch rows are NaN but confined to their row and sliced off.)
        sq = jnp.sum(feat * feat, axis=-1, keepdims=True)
        feat = feat * jax.lax.rsqrt(sq)

        # Linear(512, 256) -> ReLU  (bf16 MXU operands, f32 accumulate/bias/activation)
        h = jnp.dot(feat.astype(jnp.bfloat16), w1_ref[...],
                    preferred_element_type=jnp.float32) + b1_ref[...]
        h = jnp.maximum(h, 0.0)
        # Dropout(0.5): identity in eval/inference mode.
        # TODO(synk): training-mode dropout (stochastic mask via pltpu.prng_random_bits)
        # is not implemented.

        # Linear(256, 1) -> Sigmoid, produced directly as a lane-dense (1, TILE_B) row:
        #   logit[0, b] = sum_c w2[0, c] * h[b, c] + b2
        logit = jax.lax.dot_general(
            w2_ref[...], h,
            dimension_numbers=(((1,), (1,)), ((), ())),
            preferred_element_type=jnp.float32) + b2_ref[0, 0]
        o_ref[...] = jax.nn.sigmoid(logit)


# --------------------------------------------------------------------------- tiling


def _device_tiling():
    """Per-generation (TILE_B, TILE_K, scoped-VMEM) targets."""
    kind = ""
    try:
        kind = jax.devices()[0].device_kind.lower()
    except Exception:
        pass
    if ("v5 lite" in kind) or ("v5e" in kind) or ("v5lite" in kind):
        # v5e: MXU-bound past tile_b~512; prefer larger tile_k (single vst slot).
        return dict(tile_b=512, tile_k=8192, vmem=64 * 1024 * 1024, two_core=False)
    if "v6" in kind:
        # v6e: permanently HBM-bound for this shape; push tile_b as large as VMEM allows.
        return dict(tile_b=2048, tile_k=4096, vmem=80 * 1024 * 1024, two_core=False)
    if ("v7" in kind) or ("7x" in kind):
        # v7x: 64 MiB physical VMEM, 2 TensorCores; modest tiles, keep nb >= 2.
        return dict(tile_b=1024, tile_k=2048, vmem=48 * 1024 * 1024, two_core=True)
    return dict(tile_b=1024, tile_k=4096, vmem=64 * 1024 * 1024, two_core=False)


def _pick_tile_k(d_in, tk_max):
    """Largest legal K tile <= tk_max, preferring an exact divisor of d_in (no padding)."""
    if d_in <= tk_max:
        return d_in                       # full-extent K block is always a legal shape
    t = (tk_max // 128) * 128
    while t >= 128:
        if d_in % t == 0:
            return t                      # exact divisor, multiple of 128 -> no K pad
        t -= 128
    return (tk_max // 128) * 128          # rare fallback: K padding required


# --------------------------------------------------------------------------- wrapper


def clip_binary_classifier(images, params, *, tile_b=None, tile_k=None,
                           vmem_limit_bytes=None):
    """images: (B, C, H, W) float32. params: output of prepare_params().
    Returns (B, 1) float32 sigmoid scores."""
    wenc_bf, w1_bf, b1, w2_row, b2 = params

    B = images.shape[0]
    d_in = images.shape[1] * images.shape[2] * images.shape[3]
    assert wenc_bf.shape == (d_in, ENC_DIM)

    cfg = _device_tiling()
    if vmem_limit_bytes is None:
        vmem_limit_bytes = cfg["vmem"]

    # --- batch tile: as large as the per-chip target allows; split across the two
    #     v7x TensorCores when the whole batch would otherwise land on one core. ---
    if tile_b is None:
        tile_b = min(cfg["tile_b"], _round_up(B, 16))
        if cfg["two_core"] and B > 256 and B <= cfg["tile_b"]:
            tile_b = max(128, _round_up((B + 1) // 2, 128))

    # --- K tile: exact divisor of d_in whenever possible -> no padded copies of x/wenc ---
    if tile_k is None:
        tile_k = _pick_tile_k(d_in, cfg["tile_k"])

    b_pad = _round_up(B, tile_b)
    k_pad = _round_up(d_in, tile_k)
    nb = b_pad // tile_b
    nk = k_pad // tile_k

    # Single bf16 cast of the activation (reshape is a view); pad only when a remainder
    # actually exists (common case: no K pad because tile_k divides d_in exactly).
    x = images.reshape(B, d_in).astype(jnp.bfloat16)
    if (b_pad != B) or (k_pad != d_in):
        x = jnp.pad(x, ((0, b_pad - B), (0, k_pad - d_in)))
    if k_pad != d_in:
        # Rare fallback (d_in not divisible by any 128-multiple <= tile_k budget).
        wenc_bf = jnp.pad(wenc_bf, ((0, k_pad - d_in), (0, 0)))

    # Accumulator only needed when the K reduction spans multiple grid steps.
    acc_shape = (tile_b, ENC_DIM) if nk > 1 else (8, 128)

    flops = (2 * b_pad * k_pad * ENC_DIM
             + 2 * b_pad * ENC_DIM * HID_DIM
             + 2 * b_pad * HID_DIM)
    bytes_accessed = (b_pad * k_pad * 2                 # x (bf16)
                      + nb * k_pad * ENC_DIM * 2        # wenc re-streamed per B tile
                      + ENC_DIM * HID_DIM * 2           # w1
                      + 2 * HID_DIM * 4 + 4             # b1, w2, b2
                      + b_pad * 4)                      # output

    kernel = functools.partial(clip_binary_classifier_kernel, nk_static=nk)

    out = pl.pallas_call(
        kernel,
        out_shape=jax.ShapeDtypeStruct((1, b_pad), jnp.float32),
        grid=(nb, nk),
        in_specs=[
            pl.BlockSpec((tile_b, tile_k), lambda i, k: (i, k)),      # x tile
            pl.BlockSpec((tile_k, ENC_DIM), lambda i, k: (k, 0)),     # wenc tile
            pl.BlockSpec((ENC_DIM, HID_DIM), lambda i, k: (0, 0)),    # w1 (resident)
            pl.BlockSpec((1, HID_DIM), lambda i, k: (0, 0)),          # b1 (resident)
            pl.BlockSpec((1, HID_DIM), lambda i, k: (0, 0)),          # w2 row (resident)
            pl.BlockSpec(memory_space=pltpu.MemorySpace.SMEM),        # b2 scalar
        ],
        out_specs=pl.BlockSpec((1, tile_b), lambda i, k: (0, i)),     # lane-dense scores
        scratch_shapes=[pltpu.VMEM(acc_shape, jnp.float32)],
        compiler_params=pltpu.CompilerParams(
            dimension_semantics=("parallel", "arbitrary"),
            vmem_limit_bytes=vmem_limit_bytes,
        ),
        cost_estimate=pl.CostEstimate(
            flops=flops, transcendentals=2 * b_pad, bytes_accessed=bytes_accessed),
    )(x, wenc_bf, w1_bf, b1, w2_row, b2)

    return out[0, :B].reshape(B, 1)


# --------------------------------------------------------------------------- params


def init_params(key, d_in):
    """Deterministic synthetic f32 parameters matching the module's __init__ shapes."""
    k_enc, k1, k2 = jax.random.split(key, 3)

    # Stand-in CLIP image-encoder projection (frozen in the original model).
    wenc = jax.random.normal(k_enc, (d_in, ENC_DIM), dtype=jnp.float32) * (d_in ** -0.5)

    # nn.Linear(512, 256): kaiming_normal_(mode='fan_out', nonlinearity='relu')
    #   -> std = sqrt(2 / fan_out) = sqrt(2 / 256); bias = 0. Stored transposed (in, out).
    w1 = jax.random.normal(k1, (ENC_DIM, HID_DIM), dtype=jnp.float32) * jnp.sqrt(2.0 / HID_DIM)
    b1 = jnp.zeros((1, HID_DIM), dtype=jnp.float32)

    # nn.Linear(256, 1): std = sqrt(2 / 1); bias = 0. Stored as its native (out, in) = (1, 256)
    # row, which is also the lane-dense layout the kernel wants.
    w2_row = jax.random.normal(k2, (1, HID_DIM), dtype=jnp.float32) * jnp.sqrt(2.0)
    b2 = jnp.zeros((1, 1), dtype=jnp.float32)

    return (wenc, w1, b1, w2_row, b2)


def prepare_params(params):
    """One-time weight prep, hoisted out of the per-call path (the encoder is frozen):
    bf16 MXU copies of wenc / w1; f32 bias / head weights."""
    wenc, w1, b1, w2_row, b2 = params
    return (wenc.astype(jnp.bfloat16),
            w1.astype(jnp.bfloat16),
            b1.astype(jnp.float32),
            w2_row.astype(jnp.float32),
            b2.astype(jnp.float32))


def reference_forward(images, prepared_params):
    """Pure-JAX f32 reference of the module's forward pass (same bf16-rounded weights)."""
    wenc_bf, w1_bf, b1, w2_row, b2 = prepared_params
    B = images.shape[0]
    x = images.reshape(B, -1).astype(jnp.float32)
    feat = x @ wenc_bf.astype(jnp.float32)
    feat = feat / jnp.linalg.norm(feat, axis=1, keepdims=True)
    h = jnp.maximum(feat @ w1_bf.astype(jnp.float32) + b1, 0.0)
    logit = h @ w2_row.T + b2
    return jax.nn.sigmoid(logit)


# --------------------------------------------------------------------------- demo


if __name__ == "__main__":
    key = jax.random.PRNGKey(0)
    k_img, k_par = jax.random.split(key)

    # Small shapes: batch=2, channels=4, spatial=16 (NCHW like PyTorch).
    B, C, H, W = 2, 4, 16, 16
    images = jax.random.normal(k_img, (B, C, H, W), dtype=jnp.float32)
    params = prepare_params(init_params(k_par, C * H * W))   # weight prep: once, not per call

    # tile_k=512 forces a 2-step K reduction so the accumulator / pl.when pipeline path
    # is exercised even at this tiny demo size (512 divides d_in=1024 -> no padding).
    out = clip_binary_classifier(images, params, tile_k=512)
    out = jax.block_until_ready(out)

    ref = reference_forward(images, params)

    assert out.shape == (B, 1)
    assert out.dtype == jnp.float32
    assert bool(jnp.all((out >= 0.0) & (out <= 1.0)))
    assert bool(jnp.allclose(out, ref, atol=5e-2)), (out, ref)
    print("KERNEL_OK")
</pallas_src>

<mosaic_0001>
module attributes {stable_mosaic.version = 11 : i64} {
  func.func @clip_binary_classifier_kernel(%arg0: i32, %arg1: i32, %arg2: memref<16x512xbf16, #tpu.memory_space<vmem>>, %arg3: memref<512x512xbf16, #tpu.memory_space<vmem>>, %arg4: memref<512x256xbf16, #tpu.memory_space<vmem>>, %arg5: memref<1x256xf32, #tpu.memory_space<vmem>>, %arg6: memref<1x256xf32, #tpu.memory_space<vmem>>, %arg7: memref<1x1xf32, #tpu.memory_space<smem>>, %arg8: memref<1x16xf32, #tpu.memory_space<vmem>>, %arg9: memref<16x512xf32, #tpu.memory_space<vmem>>) attributes {dimension_semantics = [#tpu.dimension_semantics<parallel>, #tpu.dimension_semantics<arbitrary>], iteration_bounds = array<i64: 1, 2>, scalar_prefetch = 0 : i64, scratch_operands = 1 : i64, tpu.core_type = #tpu.core_type<tc>, window_params = [{transform_indices = @transform_0, window_bounds = array<i64: 16, 512>}, {transform_indices = @transform_1, window_bounds = array<i64: 512, 512>}, {pipeline_mode = #tpu.pipeline_mode<synchronous>, transform_indices = @transform_2, window_bounds = array<i64: 512, 256>}, {pipeline_mode = #tpu.pipeline_mode<synchronous>, transform_indices = @transform_3, window_bounds = array<i64: 1, 256>}, {pipeline_mode = #tpu.pipeline_mode<synchronous>, transform_indices = @transform_4, window_bounds = array<i64: 1, 256>}, {transform_indices = @transform_5, window_bounds = array<i64: 1, 1>}, {transform_indices = @transform_6, window_bounds = array<i64: 1, 16>}]} {
    %c0 = arith.constant 0 : index
    %c0_0 = arith.constant 0 : index
    %0 = vector.load %arg2[%c0, %c0_0] : memref<16x512xbf16, #tpu.memory_space<vmem>>, vector<16x512xbf16>
    %c0_1 = arith.constant 0 : index
    %c0_2 = arith.constant 0 : index
    %1 = vector.load %arg3[%c0_1, %c0_2] : memref<512x512xbf16, #tpu.memory_space<vmem>>, vector<512x512xbf16>
    %cst = arith.constant dense<0.000000e+00> : vector<16x512xf32>
    %2 = tpu.matmul %0, %1, %cst {dimension_numbers = #tpu.dot_dimension_numbers<[1], [0], [0], [1], [0, 0, 1, 1], [], []>} : vector<16x512xbf16>, vector<512x512xbf16>, vector<16x512xf32> -> vector<16x512xf32>
    %c0_i32 = arith.constant 0 : i32
    %3 = arith.cmpi eq, %arg1, %c0_i32 : i32
    %4 = arith.extui %3 : i1 to i32
    %c0_i32_3 = arith.constant 0 : i32
    %5 = arith.cmpi ne, %4, %c0_i32_3 : i32
    scf.if %5 {
      %c0_8 = arith.constant 0 : index
      %c0_9 = arith.constant 0 : index
      %14 = vector.load %arg9[%c0_8, %c0_9] : memref<16x512xf32, #tpu.memory_space<vmem>>, vector<16x512xf32>
      tpu.vector_store %arg9[%c0_8, %c0_9], %2 {strides = array<i32>} : memref<16x512xf32, #tpu.memory_space<vmem>>, vector<16x512xf32>,
    } else {
    }
    %c0_i32_4 = arith.constant 0 : i32
    %6 = arith.cmpi sgt, %arg1, %c0_i32_4 : i32
    %c1_i32 = arith.constant 1 : i32
    %7 = arith.cmpi slt, %arg1, %c1_i32 : i32
    %8 = arith.andi %6, %7 : i1
    %9 = arith.extui %8 : i1 to i32
    %c0_i32_5 = arith.constant 0 : i32
    %10 = arith.cmpi ne, %9, %c0_i32_5 : i32
    scf.if %10 {
      %c0_8 = arith.constant 0 : index
      %c0_9 = arith.constant 0 : index
      %14 = vector.load %arg9[%c0_8, %c0_9] : memref<16x512xf32, #tpu.memory_space<vmem>>, vector<16x512xf32>
      %15 = arith.addf %14, %2 : vector<16x512xf32>
      %c0_10 = arith.constant 0 : index
      %c0_11 = arith.constant 0 : index
      %16 = vector.load %arg9[%c0_10, %c0_11] : memref<16x512xf32, #tpu.memory_space<vmem>>, vector<16x512xf32>
      tpu.vector_store %arg9[%c0_10, %c0_11], %15 {strides = array<i32>} : memref<16x512xf32, #tpu.memory_space<vmem>>, vector<16x512xf32>,
    } else {
    }
    %c1_i32_6 = arith.constant 1 : i32
    %11 = arith.cmpi eq, %arg1, %c1_i32_6 : i32
    %12 = arith.extui %11 : i1 to i32
    %c0_i32_7 = arith.constant 0 : i32
    %13 = arith.cmpi ne, %12, %c0_i32_7 : i32
    scf.if %13 {
      %c0_8 = arith.constant 0 : index
      %c0_9 = arith.constant 0 : index
      %14 = vector.load %arg9[%c0_8, %c0_9] : memref<16x512xf32, #tpu.memory_space<vmem>>, vector<16x512xf32>
      %15 = arith.addf %14, %2 : vector<16x512xf32>
      %16 = arith.mulf %15, %15 : vector<16x512xf32>
      %cst_10 = arith.constant dense<0.000000e+00> : vector<16xf32>
      %17 = vector.multi_reduction <add>, %16, %cst_10 [1] : vector<16x512xf32> to vector<16xf32>
      %18 = vector.shape_cast %17 : vector<16xf32> to vector<16x1xf32>
      %19 = math.rsqrt %18 : vector<16x1xf32>
      %20 = vector.broadcast %19 : vector<16x1xf32> to vector<16x512xf32>
      %21 = arith.mulf %15, %20 : vector<16x512xf32>
      %22 = arith.truncf %21 : vector<16x512xf32> to vector<16x512xbf16>
      %c0_11 = arith.constant 0 : index
      %c0_12 = arith.constant 0 : index
      %23 = vector.load %arg4[%c0_11, %c0_12] : memref<512x256xbf16, #tpu.memory_space<vmem>>, vector<512x256xbf16>
      %cst_13 = arith.constant dense<0.000000e+00> : vector<16x256xf32>
      %24 = tpu.matmul %22, %23, %cst_13 {dimension_numbers = #tpu.dot_dimension_numbers<[1], [0], [0], [1], [0, 0, 1, 1], [], []>} : vector<16x512xbf16>, vector<512x256xbf16>, vector<16x256xf32> -> vector<16x256xf32>
      %c0_14 = arith.constant 0 : index
      %c0_15 = arith.constant 0 : index
      %25 = vector.load %arg5[%c0_14, %c0_15] : memref<1x256xf32, #tpu.memory_space<vmem>>, vector<1x256xf32>
      %26 = vector.broadcast %25 : vector<1x256xf32> to vector<16x256xf32>
      %27 = arith.addf %24, %26 : vector<16x256xf32>
      %cst_16 = arith.constant 0.000000e+00 : f32
      %28 = vector.broadcast %cst_16 : f32 to vector<16x256xf32>
      %29 = arith.maximumf %27, %28 : vector<16x256xf32>
      %c0_17 = arith.constant 0 : index
      %c0_18 = arith.constant 0 : index
      %30 = vector.load %arg6[%c0_17, %c0_18] : memref<1x256xf32, #tpu.memory_space<vmem>>, vector<1x256xf32>
      %cst_19 = arith.constant dense<0.000000e+00> : vector<1x16xf32>
      %31 = tpu.matmul %30, %29, %cst_19 {dimension_numbers = #tpu.dot_dimension_numbers<[1], [1], [0], [0], [0, 0, 1, 0], [], []>} : vector<1x256xf32>, vector<16x256xf32>, vector<1x16xf32> -> vector<1x16xf32>
      %c0_20 = arith.constant 0 : index
      %c0_21 = arith.constant 0 : index
      %32 = memref.load %arg7[%c0_20, %c0_21] : memref<1x1xf32, #tpu.memory_space<smem>>
      %33 = vector.broadcast %32 : f32 to vector<1x16xf32>
      %34 = arith.addf %31, %33 : vector<1x16xf32>
      %35 = arith.negf %34 : vector<1x16xf32>
      %36 = math.exp %35 : vector<1x16xf32>
      %cst_22 = arith.constant 1.000000e+00 : f32
      %37 = vector.broadcast %cst_22 : f32 to vector<1x16xf32>
      %38 = arith.addf %37, %36 : vector<1x16xf32>
      %39 = arith.divf %37, %38 : vector<1x16xf32>
      %c0_23 = arith.constant 0 : index
      %c0_24 = arith.constant 0 : index
      %40 = vector.load %arg8[%c0_23, %c0_24] : memref<1x16xf32, #tpu.memory_space<vmem>>, vector<1x16xf32>
      tpu.vector_store %arg8[%c0_23, %c0_24], %39 {strides = array<i32>} : memref<1x16xf32, #tpu.memory_space<vmem>>, vector<1x16xf32>,
    } else {
    }
    return
  }
  func.func @transform_0(%arg0: i32, %arg1: i32) -> (i32, i32) {
    %c0_i32 = arith.constant 0 : i32
    return %arg0, %arg1 : i32, i32
  }
  func.func @transform_1(%arg0: i32, %arg1: i32) -> (i32, i32) {
    %c0_i32 = arith.constant 0 : i32
    %c0_i32_0 = arith.constant 0 : i32
    return %arg1, %c0_i32 : i32, i32
  }
  func.func @transform_2(%arg0: i32, %arg1: i32) -> (i32, i32) {
    %c0_i32 = arith.constant 0 : i32
    %c0_i32_0 = arith.constant 0 : i32
    %c0_i32_1 = arith.constant 0 : i32
    return %c0_i32, %c0_i32_0 : i32, i32
  }
  func.func @transform_3(%arg0: i32, %arg1: i32) -> (i32, i32) {
    %c0_i32 = arith.constant 0 : i32
    %c0_i32_0 = arith.constant 0 : i32
    %c0_i32_1 = arith.constant 0 : i32
    return %c0_i32, %c0_i32_0 : i32, i32
  }
  func.func @transform_4(%arg0: i32, %arg1: i32) -> (i32, i32) {
    %c0_i32 = arith.constant 0 : i32
    %c0_i32_0 = arith.constant 0 : i32
    %c0_i32_1 = arith.constant 0 : i32
    return %c0_i32, %c0_i32_0 : i32, i32
  }
  func.func @transform_5(%arg0: i32, %arg1: i32) -> (i32, i32) {
    %c0_i32 = arith.constant 0 : i32
    %c0_i32_0 = arith.constant 0 : i32
    %c0_i32_1 = arith.constant 0 : i32
    return %c0_i32, %c0_i32_0 : i32, i32
  }
  func.func @transform_6(%arg0: i32, %arg1: i32) -> (i32, i32) {
    %c0_i32 = arith.constant 0 : i32
    %c0_i32_0 = arith.constant 0 : i32
    return %c0_i32, %arg0 : i32, i32
  }
}

</mosaic_0001>

<llo_original>
// kernel: tpu_custom_call.1
$region0: #{tpu_custom_call.1}
  #allocation0 [shape = 'u32[]', space=smem, size = 0x4, offset = 0x4, fixed_abs, tag = 'smem constant byte address 0x4 - core index']
  #allocation1 [shape = 'u32[72,128]{1,0:T(1,128)}', space=vmem, size = 0x9000, scoped, tag = 'internal scratch']
  #allocation2 [shape = 'f32[16,512]{1,0:T(8,128)}', space=vmem, size = 0x8000, scoped, tag = 'scratch operand']
  #allocation3 [shape = 'f32[1,1]{1,0:T(1,128)S(6)}', space=smem, size = 0x200, scoped, tag = 'scoped memory for tpu_custom_call.1']
  %s0 = inlined_call_operand.hbm [shape: bf16[16,1024], index: 0, kind: input, shape index: {}]
  %s1 = inlined_call_operand.hbm [shape: bf16[1024,512], index: 1, kind: input, shape index: {}]
  %s2 = inlined_call_operand.hbm [shape: bf16[512,256], index: 2, kind: input, shape index: {}]
  %s3 = inlined_call_operand.vmem [shape: f32[1,256], index: 3, kind: input, shape index: {}]
  %s4 = inlined_call_operand.vmem [shape: f32[1,256], index: 4, kind: input, shape index: {}]
  %s5 = inlined_call_operand.<no memory space> [shape: f32[1,1], index: 5, kind: input, shape index: {}]
  %s6 = inlined_call_operand.hbm [shape: f32[1,16], index: 6, kind: output, shape index: {}]
  %s7 = sld [smem:[#allocation0]]
  $region81: #{tpu_custom_call.1} parent=0
    _
  %s9 = ssub.s32 1, %s7
  %s10 = scalar_select 0, %s9, %s7
  %11 = sst [smem:[#allocation3]] %s5
  $region1: #{tpu_custom_call.1} parent=0
    #allocation4 [shape = 'u8[32768]{0}', space=vmem, size = 0x8000, scoped, tag = 'input window, operand 0']
    #allocation5 [shape = 's32[2]{0}', space=sflag, size = 0x8, scoped, tag = 'scoped memory for tpu_custom_call.1']
    #allocation6 [shape = 's32[2]{0}', space=sflag, size = 0x8, scoped, tag = 'scoped memory for tpu_custom_call.1']
    #allocation7 [shape = 'u8[1048576]{0}', space=vmem, size = 0x100000, scoped, tag = 'input window, operand 1']
    #allocation8 [shape = 's32[2]{0}', space=sflag, size = 0x8, scoped, tag = 'scoped memory for tpu_custom_call.1']
    #allocation9 [shape = 'u8[262144]{0}', space=vmem, size = 0x40000, scoped, tag = 'input window, operand 2, single buffered']
    #allocation10 [shape = 'u8[512]{0}', space=vmem, size = 0x400, scoped, tag = 'output window, operand 0, single buffered']
    %12 = vsyncpa [#allocation5], 0
    %s13 = scalar_lea.sflag [#allocation5], 1
    %14 = vsyncpa %s13, 0
    %15 = vsyncpa [#allocation8], 0
    %s16 = scalar_lea.sflag [#allocation8], 1
    %17 = vsyncpa %s16, 0
    %18 = vsyncpa [#allocation6], 0
    loop: start=0, step=1, limit=4
    $region2: #{tpu_custom_call.1} parent=1 // loop_pre_header
      _
    $region3: #{tpu_custom_call.1} parent=1 // loop_header
      %s20 = sphi 0, %s24
      %p21 = scmp.ge.s32.totalorder %s20, 4
      %s27 = sphi 0, %s39
      %s28 = sphi 0, %s35
      %s29 = sphi 0, %s27
      %s30 = sphi 0, %s28
      %s31 = sphi 0, %s29
      %s32 = sphi 0, %s30
      %s44 = sphi 0, %s46
      %s47 = sphi 0, %s44
      %s48 = sphi 0, %s47
      %s64 = sphi 0, %s48
      %s70 = sphi 0, %s72
      %s73 = sphi 0, %s70
      %s74 = sphi 0, %s73
      %s90 = sphi 0, %s74
      %s94 = sphi 0, %s94
      %s96 = sphi 0, %s94
      %s97 = sphi 0, %s96
      %s111 = sphi 0, %s97
      %s115 = sphi 0, %s115
      %s117 = sphi 0, %s115
      %s118 = sphi 0, %s117
      %s132 = sphi 0, %s118
      %s136 = sphi 0, %s136
      %s138 = sphi 0, %s136
      %s139 = sphi 0, %s138
      %s153 = sphi 0, %s139
      %s157 = sphi 0, %s157
      %s159 = sphi 0, %s157
      %s160 = sphi 0, %s159
      %s174 = sphi 0, %s160
      %s180 = sphi 0, %s182
      %s183 = sphi 0, %s180
      %s184 = sphi 0, %s183
      %s200 = sphi 0, %s184
    $region4: #{tpu_custom_call.1} parent=1 // loop_header_branch
      %23 = sbr.rel (%p21) target = $region8
    $region5: #{tpu_custom_call.1} parent=1 // loop_body
      %s25 = ssub.s32 %s20, 1
      %s26 = ssub.s32 %s20, 2
      %s33 = sadd.s32 1, %s28
      %p34 = scmp.ge.s32.totalorder %s33, 2
      %s35 = scalar_select %p34, 0, %s33
      %s36 = sadd.s32 1, %s27
      %s37 = scalar_select %p34, %s36, %s27
      %p38 = scmp.ge.s32.totalorder %s37, 1
      %s39 = scalar_select %p38, 0, %s37
      %s40 = ssub.s32 %s27, %s39
      %s41 = ssub.s32 %s28, %s35
      %s42 = sor.u32 %s40, %s41
      %p43 = scmp.eq.s32.totalorder %s42, 0
      %s45 = sadd.s32 %s44, 1
      %s46 = scalar_select %p43, %s44, %s45
      %p49 = pneg %p43
      %p50 = scmp.eq.s32.totalorder %s20, 1
      %p51 = por %p49, %p50
      %p52 = scmp.ne.s32.totalorder %s44, %s47
      %p53 = scmp.eq.s32.totalorder %s20, 0
      %p54 = por %p52, %p53
      %p55 = scmp.ne.s32.totalorder %s44, %s47
      %p56 = scmp.eq.s32.totalorder %s25, 1
      %p57 = por %p55, %p56
      %p58 = scmp.ne.s32.totalorder %s47, %s48
      %p59 = scmp.eq.s32.totalorder %s25, 0
      %p60 = por %p58, %p59
      %p61 = scmp.ne.s32.totalorder %s47, %s48
      %p62 = scmp.eq.s32.totalorder %s26, 1
      %p63 = por %p61, %p62
      %p65 = scmp.ne.s32.totalorder %s48, %s64
      %p66 = scmp.eq.s32.totalorder %s26, 0
      %p67 = por %p65, %p66
      %s68 = ssub.s32 %s28, %s35
      %p69 = scmp.eq.s32.totalorder %s68, 0
      %s71 = sadd.s32 %s70, 1
      %s72 = scalar_select %p69, %s70, %s71
      %p75 = pneg %p69
      %p76 = scmp.eq.s32.totalorder %s20, 1
      %p77 = por %p75, %p76
      %p78 = scmp.ne.s32.totalorder %s70, %s73
      %p79 = scmp.eq.s32.totalorder %s20, 0
      %p80 = por %p78, %p79
      %p81 = scmp.ne.s32.totalorder %s70, %s73
      %p82 = scmp.eq.s32.totalorder %s25, 1
      %p83 = por %p81, %p82
      %p84 = scmp.ne.s32.totalorder %s73, %s74
      %p85 = scmp.eq.s32.totalorder %s25, 0
      %p86 = por %p84, %p85
      %p87 = scmp.ne.s32.totalorder %s73, %s74
      %p88 = scmp.eq.s32.totalorder %s26, 1
      %p89 = por %p87, %p88
      %p91 = scmp.ne.s32.totalorder %s74, %s90
      %p92 = scmp.eq.s32.totalorder %s26, 0
      %p93 = por %p91, %p92
      %s95 = sadd.s32 %s94, 1
      %p98 = scmp.eq.s32.totalorder %s20, 1
      %p99 = scmp.ne.s32.totalorder %s94, %s96
      %p100 = scmp.eq.s32.totalorder %s20, 0
      %p101 = por %p99, %p100
      %p102 = scmp.ne.s32.totalorder %s94, %s96
      %p103 = scmp.eq.s32.totalorder %s25, 1
      %p104 = por %p102, %p103
      %p105 = scmp.ne.s32.totalorder %s96, %s97
      %p106 = scmp.eq.s32.totalorder %s25, 0
      %p107 = por %p105, %p106
      %p108 = scmp.ne.s32.totalorder %s96, %s97
      %p109 = scmp.eq.s32.totalorder %s26, 1
      %p110 = por %p108, %p109
      %p112 = scmp.ne.s32.totalorder %s97, %s111
      %p113 = scmp.eq.s32.totalorder %s26, 0
      %p114 = por %p112, %p113
      %s116 = sadd.s32 %s115, 1
      %p119 = scmp.eq.s32.totalorder %s20, 1
      %p120 = scmp.ne.s32.totalorder %s115, %s117
      %p121 = scmp.eq.s32.totalorder %s20, 0
      %p122 = por %p120, %p121
      %p123 = scmp.ne.s32.totalorder %s115, %s117
      %p124 = scmp.eq.s32.totalorder %s25, 1
      %p125 = por %p123, %p124
      %p126 = scmp.ne.s32.totalorder %s117, %s118
      %p127 = scmp.eq.s32.totalorder %s25, 0
      %p128 = por %p126, %p127
      %p129 = scmp.ne.s32.totalorder %s117, %s118
      %p130 = scmp.eq.s32.totalorder %s26, 1
      %p131 = por %p129, %p130
      %p133 = scmp.ne.s32.totalorder %s118, %s132
      %p134 = scmp.eq.s32.totalorder %s26, 0
      %p135 = por %p133, %p134
      %s137 = sadd.s32 %s136, 1
      %p140 = scmp.eq.s32.totalorder %s20, 1
      %p141 = scmp.ne.s32.totalorder %s136, %s138
      %p142 = scmp.eq.s32.totalorder %s20, 0
      %p143 = por %p141, %p142
      %p144 = scmp.ne.s32.totalorder %s136, %s138
      %p145 = scmp.eq.s32.totalorder %s25, 1
      %p146 = por %p144, %p145
      %p147 = scmp.ne.s32.totalorder %s138, %s139
      %p148 = scmp.eq.s32.totalorder %s25, 0
      %p149 = por %p147, %p148
      %p150 = scmp.ne.s32.totalorder %s138, %s139
      %p151 = scmp.eq.s32.totalorder %s26, 1
      %p152 = por %p150, %p151
      %p154 = scmp.ne.s32.totalorder %s139, %s153
      %p155 = scmp.eq.s32.totalorder %s26, 0
      %p156 = por %p154, %p155
      %s158 = sadd.s32 %s157, 1
      %p161 = scmp.eq.s32.totalorder %s20, 1
      %p162 = scmp.ne.s32.totalorder %s157, %s159
      %p163 = scmp.eq.s32.totalorder %s20, 0
      %p164 = por %p162, %p163
      %p165 = scmp.ne.s32.totalorder %s157, %s159
      %p166 = scmp.eq.s32.totalorder %s25, 1
      %p167 = por %p165, %p166
      %p168 = scmp.ne.s32.totalorder %s159, %s160
      %p169 = scmp.eq.s32.totalorder %s25, 0
      %p170 = por %p168, %p169
      %p171 = scmp.ne.s32.totalorder %s159, %s160
      %p172 = scmp.eq.s32.totalorder %s26, 1
      %p173 = por %p171, %p172
      %p175 = scmp.ne.s32.totalorder %s160, %s174
      %p176 = scmp.eq.s32.totalorder %s26, 0
      %p177 = por %p175, %p176
      %s178 = ssub.s32 %s27, %s39
      %p179 = scmp.eq.s32.totalorder %s178, 0
      %s181 = sadd.s32 %s180, 1
      %s182 = scalar_select %p179, %s180, %s181
      %p185 = pneg %p179
      %p186 = scmp.eq.s32.totalorder %s20, 1
      %p187 = por %p185, %p186
      %p188 = scmp.ne.s32.totalorder %s180, %s183
      %p189 = scmp.eq.s32.totalorder %s20, 0
      %p190 = por %p188, %p189
      %p191 = scmp.ne.s32.totalorder %s180, %s183
      %p192 = scmp.eq.s32.totalorder %s25, 1
      %p193 = por %p191, %p192
      %p194 = scmp.ne.s32.totalorder %s183, %s184
      %p195 = scmp.eq.s32.totalorder %s25, 0
      %p196 = por %p194, %p195
      %p197 = scmp.ne.s32.totalorder %s183, %s184
      %p198 = scmp.eq.s32.totalorder %s26, 1
      %p199 = por %p197, %p198
      %p201 = scmp.ne.s32.totalorder %s184, %s200
      %p202 = scmp.eq.s32.totalorder %s26, 0
      %p203 = por %p201, %p202
      %p204 = scmp.le.s32.totalorder 1, %s20
      %p205 = scmp.lt.s32.totalorder %s20, 3
      %p206 = pnand %p204, %p205
      %p207 = pneg %p206
      // Predicated region
      $region9: #{tpu_custom_call.1} parent=5 // pred_check
        _
      $region10: #{tpu_custom_call.1} parent=5 // pred_check_branch
        %209 = sbr.rel (%p206) target = $region12
      $region11: #{tpu_custom_call.1} parent=5 // pred_region
        %s210 = ssub.s32 %s20, 1
        // Predicated region
        $region13: #{tpu_custom_call.1} parent=11 // pred_check
          %p211 = pneg %p107
        $region14: #{tpu_custom_call.1} parent=11 // pred_check_branch
          %213 = sbr.rel (%p211) target = $region16
        $region15: #{tpu_custom_call.1} parent=11 // pred_region
          %215 = vsyncadd [#allocation8], 0
          %s216 = sshll.u32 %s2, 4
          %s217 = int_to_ptr.hbm [resolvable:$true] %s216
          %s218 = sshll.u32 [#allocation9], 4
          %s219 = int_to_ptr.vmem [resolvable:$true] %s218
          %224 = dma.hbm_to_vmem [thread:$0]  %s217, 8192, %s219, [#allocation8], 128, 128, 8
        $region16: #{tpu_custom_call.1} parent=11 // pred_fallthru
          _
        // Predicated region
        $region17: #{tpu_custom_call.1} parent=11 // pred_check
          %p225 = pneg %p128
        $region18: #{tpu_custom_call.1} parent=11 // pred_check_branch
          %227 = sbr.rel (%p225) target = $region20
        $region19: #{tpu_custom_call.1} parent=11 // pred_region
          _
        $region20: #{tpu_custom_call.1} parent=11 // pred_fallthru
          _
        // Predicated region
        $region21: #{tpu_custom_call.1} parent=11 // pred_check
          %p228 = pneg %p149
        $region22: #{tpu_custom_call.1} parent=11 // pred_check_branch
          %230 = sbr.rel (%p228) target = $region24
        $region23: #{tpu_custom_call.1} parent=11 // pred_region
          _
        $region24: #{tpu_custom_call.1} parent=11 // pred_fallthru
          _
        // Predicated region
        $region25: #{tpu_custom_call.1} parent=11 // pred_check
          %p231 = pneg %p170
        $region26: #{tpu_custom_call.1} parent=11 // pred_check_branch
          %233 = sbr.rel (%p231) target = $region28
        $region27: #{tpu_custom_call.1} parent=11 // pred_region
          _
        $region28: #{tpu_custom_call.1} parent=11 // pred_fallthru
          _
      $region12: #{tpu_custom_call.1} parent=5 // pred_fallthru
        _
      %p234 = scmp.lt.s32.totalorder %s20, 2
      // Predicated region
      $region29: #{tpu_custom_call.1} parent=5 // pred_check
        %p235 = pneg %p234
      $region30: #{tpu_custom_call.1} parent=5 // pred_check_branch
        %237 = sbr.rel (%p235) target = $region32
      $region31: #{tpu_custom_call.1} parent=5 // pred_region
        // Predicated region
        $region33: #{tpu_custom_call.1} parent=31 // pred_check
          %p238 = pneg %p54
        $region34: #{tpu_custom_call.1} parent=31 // pred_check_branch
          %240 = sbr.rel (%p238) target = $region36
        $region35: #{tpu_custom_call.1} parent=31 // pred_region
          %s241 = sand.u32 %s44, 1
          %s242 = scalar_lea.sflag [#allocation5], %s241
          %s243 = sand.u32 %s44, 1
          %s244 = smul.addr %s243, 32
          %s245 = scalar_lea.vmem [#allocation4], %s244
          %s246 = smul.u32 2, %s27
          %s247 = smul.u32 4, %s28
          %249 = vsyncadd %s242, 0
          %s250 = smul.addr %s246, 8
          %s251 = sadd.s32 %s247, %s250
          %s252 = smul.addr %s251, 4
          %s253 = scalar_lea.hbm %s0, %s252
          %s254 = sshll.u32 %s253, 4
          %s255 = int_to_ptr.hbm [resolvable:$true] %s254
          %s256 = sshll.u32 %s245, 4
          %s257 = int_to_ptr.vmem [resolvable:$true] %s256
          %262 = dma.hbm_to_vmem [thread:$0]  %s255, 512, %s257, %s242, 512, 256, 16
        $region36: #{tpu_custom_call.1} parent=31 // pred_fallthru
          _
        // Predicated region
        $region37: #{tpu_custom_call.1} parent=31 // pred_check
          %p263 = pneg %p80
        $region38: #{tpu_custom_call.1} parent=31 // pred_check_branch
          %265 = sbr.rel (%p263) target = $region40
        $region39: #{tpu_custom_call.1} parent=31 // pred_region
          %s266 = sand.u32 %s20, 1
          %s267 = scalar_lea.sflag [#allocation8], %s266
          %s268 = sand.u32 %s70, 1
          %s269 = smul.addr %s268, 1024
          %s270 = scalar_lea.vmem [#allocation7], %s269
          %s271 = smul.u32 64, %s28
          %273 = vsyncadd %s267, 0
          %s274 = smul.addr %s271, 4
          %s275 = smul.addr %s274, 4
          %s276 = scalar_lea.hbm %s1, %s275
          %s277 = sshll.u32 %s276, 4
          %s278 = int_to_ptr.hbm [resolvable:$true] %s277
          %s279 = sshll.u32 %s270, 4
          %s280 = int_to_ptr.vmem [resolvable:$true] %s279
          %285 = dma.hbm_to_vmem [thread:$0]  %s278, 16384, %s280, %s267, 256, 256, 16
        $region40: #{tpu_custom_call.1} parent=31 // pred_fallthru
          _
      $region32: #{tpu_custom_call.1} parent=5 // pred_fallthru
        _
      %p286 = scmp.le.s32.totalorder 1, %s20
      %p287 = scmp.lt.s32.totalorder %s20, 3
      %p288 = pnand %p286, %p287
      %p289 = pneg %p288
      // Predicated region
      $region41: #{tpu_custom_call.1} parent=5 // pred_check
        _
      $region42: #{tpu_custom_call.1} parent=5 // pred_check_branch
        %291 = sbr.rel (%p288) target = $region44
      $region43: #{tpu_custom_call.1} parent=5 // pred_region
        %s292 = ssub.s32 %s20, 1
        %s293 = sand.u32 %s47, 1
        %s294 = scalar_lea.sflag [#allocation5], %s293
        %s295 = sand.u32 %s47, 1
        %s296 = smul.addr %s295, 32
        %s297 = scalar_lea.vmem [#allocation4], %s296
        // Predicated region
        $region45: #{tpu_custom_call.1} parent=43 // pred_check
          %p298 = pneg %p60
        $region46: #{tpu_custom_call.1} parent=43 // pred_check_branch
          %300 = sbr.rel (%p298) target = $region48
        $region47: #{tpu_custom_call.1} parent=43 // pred_region
          %302 = dma.done %s294, 512
        $region48: #{tpu_custom_call.1} parent=43 // pred_fallthru
          _
        %s303 = sand.u32 %s25, 1
        %s304 = scalar_lea.sflag [#allocation8], %s303
        %s305 = sand.u32 %s73, 1
        %s306 = smul.addr %s305, 1024
        %s307 = scalar_lea.vmem [#allocation7], %s306
        // Predicated region
        $region49: #{tpu_custom_call.1} parent=43 // pred_check
          %p308 = pneg %p86
        $region50: #{tpu_custom_call.1} parent=43 // pred_check_branch
          %310 = sbr.rel (%p308) target = $region52
        $region51: #{tpu_custom_call.1} parent=43 // pred_region
          %312 = dma.done %s304, 16384
        $region52: #{tpu_custom_call.1} parent=43 // pred_fallthru
          _
        // Predicated region
        $region53: #{tpu_custom_call.1} parent=43 // pred_check
          %p313 = pneg %p107
        $region54: #{tpu_custom_call.1} parent=43 // pred_check_branch
          %315 = sbr.rel (%p313) target = $region56
        $region55: #{tpu_custom_call.1} parent=43 // pred_region
          %317 = dma.done [#allocation8], 8192
        $region56: #{tpu_custom_call.1} parent=43 // pred_fallthru
          _
        %s318 = sand.u32 %s47, 1
        %s319 = scalar_lea.sflag [#allocation5], %s318
        %s320 = sand.u32 %s47, 1
        %s321 = smul.addr %s320, 32
        %s322 = scalar_lea.vmem [#allocation4], %s321
        %p323 = pneg %p60
        %p324 = pneg %p57
        %s325 = sand.u32 %s25, 1
        %s326 = scalar_lea.sflag [#allocation8], %s325
        %s327 = sand.u32 %s73, 1
        %s328 = smul.addr %s327, 1024
        %s329 = scalar_lea.vmem [#allocation7], %s328
        %p330 = pneg %p86
        %p331 = pneg %p83
        %p332 = pneg %p107
        %p333 = pneg %p104
        %p334 = pneg %p128
        %p335 = pneg %p125
        %p336 = pneg %p149
        %p337 = pneg %p146
        %p338 = pneg %p170
        %p339 = pneg %p167
        %p340 = pneg %p196
        %p341 = pneg %p193
        %s342 = smul.u32 2, %s29
        %s343 = smul.u32 4, %s30
        %s344 = smul.u32 64, %s30
        %v345 = vld [vmem:[%s297] sm:$0xff]
        %v346 = vld [vmem:[%s297 + $0x8] sm:$0xff]
        %v347 = vld [vmem:[%s297 + $0x10] sm:$0xff]
        %v348 = vld [vmem:[%s297 + $0x18] sm:$0xff]
        %v349 = vld [vmem:[%s307] sm:$0xff]
        %v350 = vld [vmem:[%s307 + $0x8] sm:$0xff]
        %v351 = vld [vmem:[%s307 + $0x10] sm:$0xff]
        %v352 = vld [vmem:[%s307 + $0x18] sm:$0xff]
        %v353 = vld [vmem:[%s307 + $0x20] sm:$0xff]
        %v354 = vld [vmem:[%s307 + $0x28] sm:$0xff]
        %v355 = vld [vmem:[%s307 + $0x30] sm:$0xff]
        %v356 = vld [vmem:[%s307 + $0x38] sm:$0xff]
        %v357 = vld [vmem:[%s307 + $0x40] sm:$0xff]
        %v358 = vld [vmem:[%s307 + $0x48] sm:$0xff]
        %v359 = vld [vmem:[%s307 + $0x50] sm:$0xff]
        %v360 = vld [vmem:[%s307 + $0x58] sm:$0xff]
        %v361 = vld [vmem:[%s307 + $0x60] sm:$0xff]
        %v362 = vld [vmem:[%s307 + $0x68] sm:$0xff]
        %v363 = vld [vmem:[%s307 + $0x70] sm:$0xff]
        %v364 = vld [vmem:[%s307 + $0x78] sm:$0xff]
        %v365 = vld [vmem:[%s307 + $0x80] sm:$0xff]
        %v366 = vld [vmem:[%s307 + $0x88] sm:$0xff]
        %v367 = vld [vmem:[%s307 + $0x90] sm:$0xff]
        %v368 = vld [vmem:[%s307 + $0x98] sm:$0xff]
        %v369 = vld [vmem:[%s307 + $0xa0] sm:$0xff]
        %v370 = vld [vmem:[%s307 + $0xa8] sm:$0xff]
        %v371 = vld [vmem:[%s307 + $0xb0] sm:$0xff]
        %v372 = vld [vmem:[%s307 + $0xb8] sm:$0xff]
        %v373 = vld [vmem:[%s307 + $0xc0] sm:$0xff]
        %v374 = vld [vmem:[%s307 + $0xc8] sm:$0xff]
        %v375 = vld [vmem:[%s307 + $0xd0] sm:$0xff]
        %v376 = vld [vmem:[%s307 + $0xd8] sm:$0xff]
        %v377 = vld [vmem:[%s307 + $0xe0] sm:$0xff]
        %v378 = vld [vmem:[%s307 + $0xe8] sm:$0xff]
        %v379 = vld [vmem:[%s307 + $0xf0] sm:$0xff]
        %v380 = vld [vmem:[%s307 + $0xf8] sm:$0xff]
        %v381 = vld [vmem:[%s307 + $0x100] sm:$0xff]
        %v382 = vld [vmem:[%s307 + $0x108] sm:$0xff]
        %v383 = vld [vmem:[%s307 + $0x110] sm:$0xff]
        %v384 = vld [vmem:[%s307 + $0x118] sm:$0xff]
        %v385 = vld [vmem:[%s307 + $0x120] sm:$0xff]
        %v386 = vld [vmem:[%s307 + $0x128] sm:$0xff]
        %v387 = vld [vmem:[%s307 + $0x130] sm:$0xff]
        %v388 = vld [vmem:[%s307 + $0x138] sm:$0xff]
        %v389 = vld [vmem:[%s307 + $0x140] sm:$0xff]
        %v390 = vld [vmem:[%s307 + $0x148] sm:$0xff]
        %v391 = vld [vmem:[%s307 + $0x150] sm:$0xff]
        %v392 = vld [vmem:[%s307 + $0x158] sm:$0xff]
        %v393 = vld [vmem:[%s307 + $0x160] sm:$0xff]
        %v394 = vld [vmem:[%s307 + $0x168] sm:$0xff]
        %v395 = vld [vmem:[%s307 + $0x170] sm:$0xff]
        %v396 = vld [vmem:[%s307 + $0x178] sm:$0xff]
        %v397 = vld [vmem:[%s307 + $0x180] sm:$0xff]
        %v398 = vld [vmem:[%s307 + $0x188] sm:$0xff]
        %v399 = vld [vmem:[%s307 + $0x190] sm:$0xff]
        %v400 = vld [vmem:[%s307 + $0x198] sm:$0xff]
        %v401 = vld [vmem:[%s307 + $0x1a0] sm:$0xff]
        %v402 = vld [vmem:[%s307 + $0x1a8] sm:$0xff]
        %v403 = vld [vmem:[%s307 + $0x1b0] sm:$0xff]
        %v404 = vld [vmem:[%s307 + $0x1b8] sm:$0xff]
        %v405 = vld [vmem:[%s307 + $0x1c0] sm:$0xff]
        %v406 = vld [vmem:[%s307 + $0x1c8] sm:$0xff]
        %v407 = vld [vmem:[%s307 + $0x1d0] sm:$0xff]
        %v408 = vld [vmem:[%s307 + $0x1d8] sm:$0xff]
        %v409 = vld [vmem:[%s307 + $0x1e0] sm:$0xff]
        %v410 = vld [vmem:[%s307 + $0x1e8] sm:$0xff]
        %v411 = vld [vmem:[%s307 + $0x1f0] sm:$0xff]
        %v412 = vld [vmem:[%s307 + $0x1f8] sm:$0xff]
        %v413 = vld [vmem:[%s307 + $0x200] sm:$0xff]
        %v414 = vld [vmem:[%s307 + $0x208] sm:$0xff]
        %v415 = vld [vmem:[%s307 + $0x210] sm:$0xff]
        %v416 = vld [vmem:[%s307 + $0x218] sm:$0xff]
        %v417 = vld [vmem:[%s307 + $0x220] sm:$0xff]
        %v418 = vld [vmem:[%s307 + $0x228] sm:$0xff]
        %v419 = vld [vmem:[%s307 + $0x230] sm:$0xff]
        %v420 = vld [vmem:[%s307 + $0x238] sm:$0xff]
        %v421 = vld [vmem:[%s307 + $0x240] sm:$0xff]
        %v422 = vld [vmem:[%s307 + $0x248] sm:$0xff]
        %v423 = vld [vmem:[%s307 + $0x250] sm:$0xff]
        %v424 = vld [vmem:[%s307 + $0x258] sm:$0xff]
        %v425 = vld [vmem:[%s307 + $0x260] sm:$0xff]
        %v426 = vld [vmem:[%s307 + $0x268] sm:$0xff]
        %v427 = vld [vmem:[%s307 + $0x270] sm:$0xff]
        %v428 = vld [vmem:[%s307 + $0x278] sm:$0xff]
        %v429 = vld [vmem:[%s307 + $0x280] sm:$0xff]
        %v430 = vld [vmem:[%s307 + $0x288] sm:$0xff]
        %v431 = vld [vmem:[%s307 + $0x290] sm:$0xff]
        %v432 = vld [vmem:[%s307 + $0x298] sm:$0xff]
        %v433 = vld [vmem:[%s307 + $0x2a0] sm:$0xff]
        %v434 = vld [vmem:[%s307 + $0x2a8] sm:$0xff]
        %v435 = vld [vmem:[%s307 + $0x2b0] sm:$0xff]
        %v436 = vld [vmem:[%s307 + $0x2b8] sm:$0xff]
        %v437 = vld [vmem:[%s307 + $0x2c0] sm:$0xff]
        %v438 = vld [vmem:[%s307 + $0x2c8] sm:$0xff]
        %v439 = vld [vmem:[%s307 + $0x2d0] sm:$0xff]
        %v440 = vld [vmem:[%s307 + $0x2d8] sm:$0xff]
        %v441 = vld [vmem:[%s307 + $0x2e0] sm:$0xff]
        %v442 = vld [vmem:[%s307 + $0x2e8] sm:$0xff]
        %v443 = vld [vmem:[%s307 + $0x2f0] sm:$0xff]
        %v444 = vld [vmem:[%s307 + $0x2f8] sm:$0xff]
        %v445 = vld [vmem:[%s307 + $0x300] sm:$0xff]
        %v446 = vld [vmem:[%s307 + $0x308] sm:$0xff]
        %v447 = vld [vmem:[%s307 + $0x310] sm:$0xff]
        %v448 = vld [vmem:[%s307 + $0x318] sm:$0xff]
        %v449 = vld [vmem:[%s307 + $0x320] sm:$0xff]
        %v450 = vld [vmem:[%s307 + $0x328] sm:$0xff]
        %v451 = vld [vmem:[%s307 + $0x330] sm:$0xff]
        %v452 = vld [vmem:[%s307 + $0x338] sm:$0xff]
        %v453 = vld [vmem:[%s307 + $0x340] sm:$0xff]
        %v454 = vld [vmem:[%s307 + $0x348] sm:$0xff]
        %v455 = vld [vmem:[%s307 + $0x350] sm:$0xff]
        %v456 = vld [vmem:[%s307 + $0x358] sm:$0xff]
        %v457 = vld [vmem:[%s307 + $0x360] sm:$0xff]
        %v458 = vld [vmem:[%s307 + $0x368] sm:$0xff]
        %v459 = vld [vmem:[%s307 + $0x370] sm:$0xff]
        %v460 = vld [vmem:[%s307 + $0x378] sm:$0xff]
        %v461 = vld [vmem:[%s307 + $0x380] sm:$0xff]
        %v462 = vld [vmem:[%s307 + $0x388] sm:$0xff]
        %v463 = vld [vmem:[%s307 + $0x390] sm:$0xff]
        %v464 = vld [vmem:[%s307 + $0x398] sm:$0xff]
        %v465 = vld [vmem:[%s307 + $0x3a0] sm:$0xff]
        %v466 = vld [vmem:[%s307 + $0x3a8] sm:$0xff]
        %v467 = vld [vmem:[%s307 + $0x3b0] sm:$0xff]
        %v468 = vld [vmem:[%s307 + $0x3b8] sm:$0xff]
        %v469 = vld [vmem:[%s307 + $0x3c0] sm:$0xff]
        %v470 = vld [vmem:[%s307 + $0x3c8] sm:$0xff]
        %v471 = vld [vmem:[%s307 + $0x3d0] sm:$0xff]
        %v472 = vld [vmem:[%s307 + $0x3d8] sm:$0xff]
        %v473 = vld [vmem:[%s307 + $0x3e0] sm:$0xff]
        %v474 = vld [vmem:[%s307 + $0x3e8] sm:$0xff]
        %v475 = vld [vmem:[%s307 + $0x3f0] sm:$0xff]
        %v476 = vld [vmem:[%s307 + $0x3f8] sm:$0xff]
        %v481 = vunpack.c.l.b16 %v345
        %v482 = vunpack.c.h.b16 %v345
        %v483 = vunpack.c.l.b16 %v346
        %v484 = vunpack.c.h.b16 %v346
        %v485 = vunpack.c.l.b16 %v347
        %v486 = vunpack.c.h.b16 %v347
        %v487 = vunpack.c.l.b16 %v348
        %v488 = vunpack.c.h.b16 %v348
        %v489 = vpack.c.b16 %v485, %v481
        %v490 = vpack.c.b16 %v486, %v482
        %v491 = vpack.c.b16 %v487, %v483
        %v492 = vpack.c.b16 %v488, %v484
        %v625 = vunpack.c.l.b16 %v349
        %v626 = vunpack.c.h.b16 %v349
        %v627 = vunpack.c.l.b16 %v350
        %v628 = vunpack.c.h.b16 %v350
        %v629 = vunpack.c.l.b16 %v351
        %v630 = vunpack.c.h.b16 %v351
        %v631 = vunpack.c.l.b16 %v352
        %v632 = vunpack.c.h.b16 %v352
        %v633 = vunpack.c.l.b16 %v353
        %v634 = vunpack.c.h.b16 %v353
        %v635 = vunpack.c.l.b16 %v354
        %v636 = vunpack.c.h.b16 %v354
        %v637 = vunpack.c.l.b16 %v355
        %v638 = vunpack.c.h.b16 %v355
        %v639 = vunpack.c.l.b16 %v356
        %v640 = vunpack.c.h.b16 %v356
        %v641 = vunpack.c.l.b16 %v357
        %v642 = vunpack.c.h.b16 %v357
        %v643 = vunpack.c.l.b16 %v358
        %v644 = vunpack.c.h.b16 %v358
        %v645 = vunpack.c.l.b16 %v359
        %v646 = vunpack.c.h.b16 %v359
        %v647 = vunpack.c.l.b16 %v360
        %v648 = vunpack.c.h.b16 %v360
        %v649 = vunpack.c.l.b16 %v361
        %v650 = vunpack.c.h.b16 %v361
        %v651 = vunpack.c.l.b16 %v362
        %v652 = vunpack.c.h.b16 %v362
        %v653 = vunpack.c.l.b16 %v363
        %v654 = vunpack.c.h.b16 %v363
        %v655 = vunpack.c.l.b16 %v364
        %v656 = vunpack.c.h.b16 %v364
        %v657 = vunpack.c.l.b16 %v365
        %v658 = vunpack.c.h.b16 %v365
        %v659 = vunpack.c.l.b16 %v366
        %v660 = vunpack.c.h.b16 %v366
        %v661 = vunpack.c.l.b16 %v367
        %v662 = vunpack.c.h.b16 %v367
        %v663 = vunpack.c.l.b16 %v368
        %v664 = vunpack.c.h.b16 %v368
        %v665 = vunpack.c.l.b16 %v369
        %v666 = vunpack.c.h.b16 %v369
        %v667 = vunpack.c.l.b16 %v370
        %v668 = vunpack.c.h.b16 %v370
        %v669 = vunpack.c.l.b16 %v371
        %v670 = vunpack.c.h.b16 %v371
        %v671 = vunpack.c.l.b16 %v372
        %v672 = vunpack.c.h.b16 %v372
        %v673 = vunpack.c.l.b16 %v373
        %v674 = vunpack.c.h.b16 %v373
        %v675 = vunpack.c.l.b16 %v374
        %v676 = vunpack.c.h.b16 %v374
        %v677 = vunpack.c.l.b16 %v375
        %v678 = vunpack.c.h.b16 %v375
        %v679 = vunpack.c.l.b16 %v376
        %v680 = vunpack.c.h.b16 %v376
        %v681 = vunpack.c.l.b16 %v377
        %v682 = vunpack.c.h.b16 %v377
        %v683 = vunpack.c.l.b16 %v378
        %v684 = vunpack.c.h.b16 %v378
        %v685 = vunpack.c.l.b16 %v379
        %v686 = vunpack.c.h.b16 %v379
        %v687 = vunpack.c.l.b16 %v380
        %v688 = vunpack.c.h.b16 %v380
        %v689 = vunpack.c.l.b16 %v381
        %v690 = vunpack.c.h.b16 %v381
        %v691 = vunpack.c.l.b16 %v382
        %v692 = vunpack.c.h.b16 %v382
        %v693 = vunpack.c.l.b16 %v383
        %v694 = vunpack.c.h.b16 %v383
        %v695 = vunpack.c.l.b16 %v384
        %v696 = vunpack.c.h.b16 %v384
        %v697 = vunpack.c.l.b16 %v385
        %v698 = vunpack.c.h.b16 %v385
        %v699 = vunpack.c.l.b16 %v386
        %v700 = vunpack.c.h.b16 %v386
        %v701 = vunpack.c.l.b16 %v387
        %v702 = vunpack.c.h.b16 %v387
        %v703 = vunpack.c.l.b16 %v388
        %v704 = vunpack.c.h.b16 %v388
        %v705 = vunpack.c.l.b16 %v389
        %v706 = vunpack.c.h.b16 %v389
        %v707 = vunpack.c.l.b16 %v390
        %v708 = vunpack.c.h.b16 %v390
        %v709 = vunpack.c.l.b16 %v391
        %v710 = vunpack.c.h.b16 %v391
        %v711 = vunpack.c.l.b16 %v392
        %v712 = vunpack.c.h.b16 %v392
        %v713 = vunpack.c.l.b16 %v393
        %v714 = vunpack.c.h.b16 %v393
        %v715 = vunpack.c.l.b16 %v394
        %v716 = vunpack.c.h.b16 %v394
        %v717 = vunpack.c.l.b16 %v395
        %v718 = vunpack.c.h.b16 %v395
        %v719 = vunpack.c.l.b16 %v396
        %v720 = vunpack.c.h.b16 %v396
        %v721 = vunpack.c.l.b16 %v397
        %v722 = vunpack.c.h.b16 %v397
        %v723 = vunpack.c.l.b16 %v398
        %v724 = vunpack.c.h.b16 %v398
        %v725 = vunpack.c.l.b16 %v399
        %v726 = vunpack.c.h.b16 %v399
        %v727 = vunpack.c.l.b16 %v400
        %v728 = vunpack.c.h.b16 %v400
        %v729 = vunpack.c.l.b16 %v401
        %v730 = vunpack.c.h.b16 %v401
        %v731 = vunpack.c.l.b16 %v402
        %v732 = vunpack.c.h.b16 %v402
        %v733 = vunpack.c.l.b16 %v403
        %v734 = vunpack.c.h.b16 %v403
        %v735 = vunpack.c.l.b16 %v404
        %v736 = vunpack.c.h.b16 %v404
        %v737 = vunpack.c.l.b16 %v405
        %v738 = vunpack.c.h.b16 %v405
        %v739 = vunpack.c.l.b16 %v406
        %v740 = vunpack.c.h.b16 %v406
        %v741 = vunpack.c.l.b16 %v407
        %v742 = vunpack.c.h.b16 %v407
        %v743 = vunpack.c.l.b16 %v408
        %v744 = vunpack.c.h.b16 %v408
        %v745 = vunpack.c.l.b16 %v409
        %v746 = vunpack.c.h.b16 %v409
        %v747 = vunpack.c.l.b16 %v410
        %v748 = vunpack.c.h.b16 %v410
        %v749 = vunpack.c.l.b16 %v411
        %v750 = vunpack.c.h.b16 %v411
        %v751 = vunpack.c.l.b16 %v412
        %v752 = vunpack.c.h.b16 %v412
        %v753 = vunpack.c.l.b16 %v413
        %v754 = vunpack.c.h.b16 %v413
        %v755 = vunpack.c.l.b16 %v414
        %v756 = vunpack.c.h.b16 %v414
        %v757 = vunpack.c.l.b16 %v415
        %v758 = vunpack.c.h.b16 %v415
        %v759 = vunpack.c.l.b16 %v416
        %v760 = vunpack.c.h.b16 %v416
        %v761 = vunpack.c.l.b16 %v417
        %v762 = vunpack.c.h.b16 %v417
        %v763 = vunpack.c.l.b16 %v418
        %v764 = vunpack.c.h.b16 %v418
        %v765 = vunpack.c.l.b16 %v419
        %v766 = vunpack.c.h.b16 %v419
        %v767 = vunpack.c.l.b16 %v420
        %v768 = vunpack.c.h.b16 %v420
        %v769 = vunpack.c.l.b16 %v421
        %v770 = vunpack.c.h.b16 %v421
        %v771 = vunpack.c.l.b16 %v422
        %v772 = vunpack.c.h.b16 %v422
        %v773 = vunpack.c.l.b16 %v423
        %v774 = vunpack.c.h.b16 %v423
        %v775 = vunpack.c.l.b16 %v424
        %v776 = vunpack.c.h.b16 %v424
        %v777 = vunpack.c.l.b16 %v425
        %v778 = vunpack.c.h.b16 %v425
        %v779 = vunpack.c.l.b16 %v426
        %v780 = vunpack.c.h.b16 %v426
        %v781 = vunpack.c.l.b16 %v427
        %v782 = vunpack.c.h.b16 %v427
        %v783 = vunpack.c.l.b16 %v428
        %v784 = vunpack.c.h.b16 %v428
        %v785 = vunpack.c.l.b16 %v429
        %v786 = vunpack.c.h.b16 %v429
        %v787 = vunpack.c.l.b16 %v430
        %v788 = vunpack.c.h.b16 %v430
        %v789 = vunpack.c.l.b16 %v431
        %v790 = vunpack.c.h.b16 %v431
        %v791 = vunpack.c.l.b16 %v432
        %v792 = vunpack.c.h.b16 %v432
        %v793 = vunpack.c.l.b16 %v433
        %v794 = vunpack.c.h.b16 %v433
        %v795 = vunpack.c.l.b16 %v434
        %v796 = vunpack.c.h.b16 %v434
        %v797 = vunpack.c.l.b16 %v435
        %v798 = vunpack.c.h.b16 %v435
        %v799 = vunpack.c.l.b16 %v436
        %v800 = vunpack.c.h.b16 %v436
        %v801 = vunpack.c.l.b16 %v437
        %v802 = vunpack.c.h.b16 %v437
        %v803 = vunpack.c.l.b16 %v438
        %v804 = vunpack.c.h.b16 %v438
        %v805 = vunpack.c.l.b16 %v439
        %v806 = vunpack.c.h.b16 %v439
        %v807 = vunpack.c.l.b16 %v440
        %v808 = vunpack.c.h.b16 %v440
        %v809 = vunpack.c.l.b16 %v441
        %v810 = vunpack.c.h.b16 %v441
        %v811 = vunpack.c.l.b16 %v442
        %v812 = vunpack.c.h.b16 %v442
        %v813 = vunpack.c.l.b16 %v443
        %v814 = vunpack.c.h.b16 %v443
        %v815 = vunpack.c.l.b16 %v444
        %v816 = vunpack.c.h.b16 %v444
        %v817 = vunpack.c.l.b16 %v445
        %v818 = vunpack.c.h.b16 %v445
        %v819 = vunpack.c.l.b16 %v446
        %v820 = vunpack.c.h.b16 %v446
        %v821 = vunpack.c.l.b16 %v447
        %v822 = vunpack.c.h.b16 %v447
        %v823 = vunpack.c.l.b16 %v448
        %v824 = vunpack.c.h.b16 %v448
        %v825 = vunpack.c.l.b16 %v449
        %v826 = vunpack.c.h.b16 %v449
        %v827 = vunpack.c.l.b16 %v450
        %v828 = vunpack.c.h.b16 %v450
        %v829 = vunpack.c.l.b16 %v451
        %v830 = vunpack.c.h.b16 %v451
        %v831 = vunpack.c.l.b16 %v452
        %v832 = vunpack.c.h.b16 %v452
        %v833 = vunpack.c.l.b16 %v453
        %v834 = vunpack.c.h.b16 %v453
        %v835 = vunpack.c.l.b16 %v454
        %v836 = vunpack.c.h.b16 %v454
        %v837 = vunpack.c.l.b16 %v455
        %v838 = vunpack.c.h.b16 %v455
        %v839 = vunpack.c.l.b16 %v456
        %v840 = vunpack.c.h.b16 %v456
        %v841 = vunpack.c.l.b16 %v457
        %v842 = vunpack.c.h.b16 %v457
        %v843 = vunpack.c.l.b16 %v458
        %v844 = vunpack.c.h.b16 %v458
        %v845 = vunpack.c.l.b16 %v459
        %v846 = vunpack.c.h.b16 %v459
        %v847 = vunpack.c.l.b16 %v460
        %v848 = vunpack.c.h.b16 %v460
        %v849 = vunpack.c.l.b16 %v461
        %v850 = vunpack.c.h.b16 %v461
        %v851 = vunpack.c.l.b16 %v462
        %v852 = vunpack.c.h.b16 %v462
        %v853 = vunpack.c.l.b16 %v463
        %v854 = vunpack.c.h.b16 %v463
        %v855 = vunpack.c.l.b16 %v464
        %v856 = vunpack.c.h.b16 %v464
        %v857 = vunpack.c.l.b16 %v465
        %v858 = vunpack.c.h.b16 %v465
        %v859 = vunpack.c.l.b16 %v466
        %v860 = vunpack.c.h.b16 %v466
        %v861 = vunpack.c.l.b16 %v467
        %v862 = vunpack.c.h.b16 %v467
        %v863 = vunpack.c.l.b16 %v468
        %v864 = vunpack.c.h.b16 %v468
        %v865 = vunpack.c.l.b16 %v469
        %v866 = vunpack.c.h.b16 %v469
        %v867 = vunpack.c.l.b16 %v470
        %v868 = vunpack.c.h.b16 %v470
        %v869 = vunpack.c.l.b16 %v471
        %v870 = vunpack.c.h.b16 %v471
        %v871 = vunpack.c.l.b16 %v472
        %v872 = vunpack.c.h.b16 %v472
        %v873 = vunpack.c.l.b16 %v473
        %v874 = vunpack.c.h.b16 %v473
        %v875 = vunpack.c.l.b16 %v474
        %v876 = vunpack.c.h.b16 %v474
        %v877 = vunpack.c.l.b16 %v475
        %v878 = vunpack.c.h.b16 %v475
        %v879 = vunpack.c.l.b16 %v476
        %v880 = vunpack.c.h.b16 %v476
        %v881 = vpack.c.b16 %v629, %v625
        %v882 = vpack.c.b16 %v630, %v626
        %v883 = vpack.c.b16 %v631, %v627
        %v884 = vpack.c.b16 %v632, %v628
        %v885 = vpack.c.b16 %v637, %v633
        %v886 = vpack.c.b16 %v638, %v634
        %v887 = vpack.c.b16 %v639, %v635
        %v888 = vpack.c.b16 %v640, %v636
        %v889 = vpack.c.b16 %v645, %v641
        %v890 = vpack.c.b16 %v646, %v642
        %v891 = vpack.c.b16 %v647, %v643
        %v892 = vpack.c.b16 %v648, %v644
        %v893 = vpack.c.b16 %v653, %v649
        %v894 = vpack.c.b16 %v654, %v650
        %v895 = vpack.c.b16 %v655, %v651
        %v896 = vpack.c.b16 %v656, %v652
        %v897 = vpack.c.b16 %v661, %v657
        %v898 = vpack.c.b16 %v662, %v658
        %v899 = vpack.c.b16 %v663, %v659
        %v900 = vpack.c.b16 %v664, %v660
        %v901 = vpack.c.b16 %v669, %v665
        %v902 = vpack.c.b16 %v670, %v666
        %v903 = vpack.c.b16 %v671, %v667
        %v904 = vpack.c.b16 %v672, %v668
        %v905 = vpack.c.b16 %v677, %v673
        %v906 = vpack.c.b16 %v678, %v674
        %v907 = vpack.c.b16 %v679, %v675
        %v908 = vpack.c.b16 %v680, %v676
        %v909 = vpack.c.b16 %v685, %v681
        %v910 = vpack.c.b16 %v686, %v682
        %v911 = vpack.c.b16 %v687, %v683
        %v912 = vpack.c.b16 %v688, %v684
        %v913 = vpack.c.b16 %v693, %v689
        %v914 = vpack.c.b16 %v694, %v690
        %v915 = vpack.c.b16 %v695, %v691
        %v916 = vpack.c.b16 %v696, %v692
        %v917 = vpack.c.b16 %v701, %v697
        %v918 = vpack.c.b16 %v702, %v698
        %v919 = vpack.c.b16 %v703, %v699
        %v920 = vpack.c.b16 %v704, %v700
        %v921 = vpack.c.b16 %v709, %v705
        %v922 = vpack.c.b16 %v710, %v706
        %v923 = vpack.c.b16 %v711, %v707
        %v924 = vpack.c.b16 %v712, %v708
        %v925 = vpack.c.b16 %v717, %v713
        %v926 = vpack.c.b16 %v718, %v714
        %v927 = vpack.c.b16 %v719, %v715
        %v928 = vpack.c.b16 %v720, %v716
        %v929 = vpack.c.b16 %v725, %v721
        %v930 = vpack.c.b16 %v726, %v722
        %v931 = vpack.c.b16 %v727, %v723
        %v932 = vpack.c.b16 %v728, %v724
        %v933 = vpack.c.b16 %v733, %v729
        %v934 = vpack.c.b16 %v734, %v730
        %v935 = vpack.c.b16 %v735, %v731
        %v936 = vpack.c.b16 %v736, %v732
        %v937 = vpack.c.b16 %v741, %v737
        %v938 = vpack.c.b16 %v742, %v738
        %v939 = vpack.c.b16 %v743, %v739
        %v940 = vpack.c.b16 %v744, %v740
        %v941 = vpack.c.b16 %v749, %v745
        %v942 = vpack.c.b16 %v750, %v746
        %v943 = vpack.c.b16 %v751, %v747
        %v944 = vpack.c.b16 %v752, %v748
        %v945 = vpack.c.b16 %v757, %v753
        %v946 = vpack.c.b16 %v758, %v754
        %v947 = vpack.c.b16 %v759, %v755
        %v948 = vpack.c.b16 %v760, %v756
        %v949 = vpack.c.b16 %v765, %v761
        %v950 = vpack.c.b16 %v766, %v762
        %v951 = vpack.c.b16 %v767, %v763
        %v952 = vpack.c.b16 %v768, %v764
        %v953 = vpack.c.b16 %v773, %v769
        %v954 = vpack.c.b16 %v774, %v770
        %v955 = vpack.c.b16 %v775, %v771
        %v956 = vpack.c.b16 %v776, %v772
        %v957 = vpack.c.b16 %v781, %v777
        %v958 = vpack.c.b16 %v782, %v778
        %v959 = vpack.c.b16 %v783, %v779
        %v960 = vpack.c.b16 %v784, %v780
        %v961 = vpack.c.b16 %v789, %v785
        %v962 = vpack.c.b16 %v790, %v786
        %v963 = vpack.c.b16 %v791, %v787
        %v964 = vpack.c.b16 %v792, %v788
        %v965 = vpack.c.b16 %v797, %v793
        %v966 = vpack.c.b16 %v798, %v794
        %v967 = vpack.c.b16 %v799, %v795
        %v968 = vpack.c.b16 %v800, %v796
        %v969 = vpack.c.b16 %v805, %v801
        %v970 = vpack.c.b16 %v806, %v802
        %v971 = vpack.c.b16 %v807, %v803
        %v972 = vpack.c.b16 %v808, %v804
        %v973 = vpack.c.b16 %v813, %v809
        %v974 = vpack.c.b16 %v814, %v810
        %v975 = vpack.c.b16 %v815, %v811
        %v976 = vpack.c.b16 %v816, %v812
        %v977 = vpack.c.b16 %v821, %v817
        %v978 = vpack.c.b16 %v822, %v818
        %v979 = vpack.c.b16 %v823, %v819
        %v980 = vpack.c.b16 %v824, %v820
        %v981 = vpack.c.b16 %v829, %v825
        %v982 = vpack.c.b16 %v830, %v826
        %v983 = vpack.c.b16 %v831, %v827
        %v984 = vpack.c.b16 %v832, %v828
        %v985 = vpack.c.b16 %v837, %v833
        %v986 = vpack.c.b16 %v838, %v834
        %v987 = vpack.c.b16 %v839, %v835
        %v988 = vpack.c.b16 %v840, %v836
        %v989 = vpack.c.b16 %v845, %v841
        %v990 = vpack.c.b16 %v846, %v842
        %v991 = vpack.c.b16 %v847, %v843
        %v992 = vpack.c.b16 %v848, %v844
        %v993 = vpack.c.b16 %v853, %v849
        %v994 = vpack.c.b16 %v854, %v850
        %v995 = vpack.c.b16 %v855, %v851
        %v996 = vpack.c.b16 %v856, %v852
        %v997 = vpack.c.b16 %v861, %v857
        %v998 = vpack.c.b16 %v862, %v858
        %v999 = vpack.c.b16 %v863, %v859
        %v1000 = vpack.c.b16 %v864, %v860
        %v1001 = vpack.c.b16 %v869, %v865
        %v1002 = vpack.c.b16 %v870, %v866
        %v1003 = vpack.c.b16 %v871, %v867
        %v1004 = vpack.c.b16 %v872, %v868
        %v1005 = vpack.c.b16 %v877, %v873
        %v1006 = vpack.c.b16 %v878, %v874
        %v1007 = vpack.c.b16 %v879, %v875
        %v1008 = vpack.c.b16 %v880, %v876
        %1137 = vmatpush.bf16.msra.mxu0 %v909
        %1138 = vmatpush.bf16.msra.mxu0 %v905
        %1139 = vmatpush.bf16.msra.mxu0 %v901
        %1140 = vmatpush.bf16.msra.mxu0 %v897
        %1141 = vmatpush.bf16.msra.mxu0 %v893
        %1142 = vmatpush.bf16.msra.mxu0 %v889
        %1143 = vmatpush.bf16.msra.mxu0 %v885
        %1144 = vmatpush.bf16.msra.mxu0 %v881
        %1145 = vmatmul.bf16.gmra.mxu0 %v489
        %v1146 = vpop.f32.mrf.mxu0
        %v1147 = vadd.f32 0.0, %v1146
        %v1148 = vpop.f32.mrf.mxu0
        %v1149 = vadd.f32 0.0, %v1148
        %1150 = vdwg.mxu0
        %1151 = vmatpush.bf16.msra.mxu0 %v941
        %1152 = vmatpush.bf16.msra.mxu0 %v937
        %1153 = vmatpush.bf16.msra.mxu0 %v933
        %1154 = vmatpush.bf16.msra.mxu0 %v929
        %1155 = vmatpush.bf16.msra.mxu0 %v925
        %1156 = vmatpush.bf16.msra.mxu0 %v921
        %1157 = vmatpush.bf16.msra.mxu0 %v917
        %1158 = vmatpush.bf16.msra.mxu0 %v913
        %1159 = vmatmul.bf16.gmra.mxu0 %v490
        %v1160 = vpop.f32.mrf.mxu0
        %v1161 = vadd.f32 %v1147, %v1160
        %v1162 = vpop.f32.mrf.mxu0
        %v1163 = vadd.f32 %v1149, %v1162
        %1164 = vdwg.mxu0
        %1165 = vmatpush.bf16.msra.mxu0 %v973
        %1166 = vmatpush.bf16.msra.mxu0 %v969
        %1167 = vmatpush.bf16.msra.mxu0 %v965
        %1168 = vmatpush.bf16.msra.mxu0 %v961
        %1169 = vmatpush.bf16.msra.mxu0 %v957
        %1170 = vmatpush.bf16.msra.mxu0 %v953
        %1171 = vmatpush.bf16.msra.mxu0 %v949
        %1172 = vmatpush.bf16.msra.mxu0 %v945
        %1173 = vmatmul.bf16.gmra.mxu0 %v491
        %v1174 = vpop.f32.mrf.mxu0
        %v1175 = vadd.f32 %v1161, %v1174
        %v1176 = vpop.f32.mrf.mxu0
        %v1177 = vadd.f32 %v1163, %v1176
        %1178 = vdwg.mxu0
        %1179 = vmatpush.bf16.msra.mxu0 %v1005
        %1180 = vmatpush.bf16.msra.mxu0 %v1001
        %1181 = vmatpush.bf16.msra.mxu0 %v997
        %1182 = vmatpush.bf16.msra.mxu0 %v993
        %1183 = vmatpush.bf16.msra.mxu0 %v989
        %1184 = vmatpush.bf16.msra.mxu0 %v985
        %1185 = vmatpush.bf16.msra.mxu0 %v981
        %1186 = vmatpush.bf16.msra.mxu0 %v977
        %1187 = vmatmul.bf16.gmra.mxu0 %v492
        %v1188 = vpop.f32.mrf.mxu0
        %v1189 = vadd.f32 %v1175, %v1188
        %v1190 = vpop.f32.mrf.mxu0
        %v1191 = vadd.f32 %v1177, %v1190
        %1192 = vdwg.mxu0
        %1193 = vmatpush.bf16.msra.mxu0 %v910
        %1194 = vmatpush.bf16.msra.mxu0 %v906
        %1195 = vmatpush.bf16.msra.mxu0 %v902
        %1196 = vmatpush.bf16.msra.mxu0 %v898
        %1197 = vmatpush.bf16.msra.mxu0 %v894
        %1198 = vmatpush.bf16.msra.mxu0 %v890
        %1199 = vmatpush.bf16.msra.mxu0 %v886
        %1200 = vmatpush.bf16.msra.mxu0 %v882
        %1201 = vmatmul.bf16.gmra.mxu0 %v489
        %v1202 = vpop.f32.mrf.mxu0
        %v1203 = vadd.f32 0.0, %v1202
        %v1204 = vpop.f32.mrf.mxu0
        %v1205 = vadd.f32 0.0, %v1204
        %1206 = vdwg.mxu0
        %1207 = vmatpush.bf16.msra.mxu0 %v942
        %1208 = vmatpush.bf16.msra.mxu0 %v938
        %1209 = vmatpush.bf16.msra.mxu0 %v934
        %1210 = vmatpush.bf16.msra.mxu0 %v930
        %1211 = vmatpush.bf16.msra.mxu0 %v926
        %1212 = vmatpush.bf16.msra.mxu0 %v922
        %1213 = vmatpush.bf16.msra.mxu0 %v918
        %1214 = vmatpush.bf16.msra.mxu0 %v914
        %1215 = vmatmul.bf16.gmra.mxu0 %v490
        %v1216 = vpop.f32.mrf.mxu0
        %v1217 = vadd.f32 %v1203, %v1216
        %v1218 = vpop.f32.mrf.mxu0
        %v1219 = vadd.f32 %v1205, %v1218
        %1220 = vdwg.mxu0
        %1221 = vmatpush.bf16.msra.mxu0 %v974
        %1222 = vmatpush.bf16.msra.mxu0 %v970
        %1223 = vmatpush.bf16.msra.mxu0 %v966
        %1224 = vmatpush.bf16.msra.mxu0 %v962
        %1225 = vmatpush.bf16.msra.mxu0 %v958
        %1226 = vmatpush.bf16.msra.mxu0 %v954
        %1227 = vmatpush.bf16.msra.mxu0 %v950
        %1228 = vmatpush.bf16.msra.mxu0 %v946
        %1229 = vmatmul.bf16.gmra.mxu0 %v491
        %v1230 = vpop.f32.mrf.mxu0
        %v1231 = vadd.f32 %v1217, %v1230
        %v1232 = vpop.f32.mrf.mxu0
        %v1233 = vadd.f32 %v1219, %v1232
        %1234 = vdwg.mxu0
        %1235 = vmatpush.bf16.msra.mxu0 %v1006
        %1236 = vmatpush.bf16.msra.mxu0 %v1002
        %1237 = vmatpush.bf16.msra.mxu0 %v998
        %1238 = vmatpush.bf16.msra.mxu0 %v994
        %1239 = vmatpush.bf16.msra.mxu0 %v990
        %1240 = vmatpush.bf16.msra.mxu0 %v986
        %1241 = vmatpush.bf16.msra.mxu0 %v982
        %1242 = vmatpush.bf16.msra.mxu0 %v978
        %1243 = vmatmul.bf16.gmra.mxu0 %v492
        %v1244 = vpop.f32.mrf.mxu0
        %v1245 = vadd.f32 %v1231, %v1244
        %v1246 = vpop.f32.mrf.mxu0
        %v1247 = vadd.f32 %v1233, %v1246
        %1248 = vdwg.mxu0
        %1249 = vmatpush.bf16.msra.mxu0 %v911
        %1250 = vmatpush.bf16.msra.mxu0 %v907
        %1251 = vmatpush.bf16.msra.mxu0 %v903
        %1252 = vmatpush.bf16.msra.mxu0 %v899
        %1253 = vmatpush.bf16.msra.mxu0 %v895
        %1254 = vmatpush.bf16.msra.mxu0 %v891
        %1255 = vmatpush.bf16.msra.mxu0 %v887
        %1256 = vmatpush.bf16.msra.mxu0 %v883
        %1257 = vmatmul.bf16.gmra.mxu0 %v489
        %v1258 = vpop.f32.mrf.mxu0
        %v1259 = vadd.f32 0.0, %v1258
        %v1260 = vpop.f32.mrf.mxu0
        %v1261 = vadd.f32 0.0, %v1260
        %1262 = vdwg.mxu0
        %1263 = vmatpush.bf16.msra.mxu0 %v943
        %1264 = vmatpush.bf16.msra.mxu0 %v939
        %1265 = vmatpush.bf16.msra.mxu0 %v935
        %1266 = vmatpush.bf16.msra.mxu0 %v931
        %1267 = vmatpush.bf16.msra.mxu0 %v927
        %1268 = vmatpush.bf16.msra.mxu0 %v923
        %1269 = vmatpush.bf16.msra.mxu0 %v919
        %1270 = vmatpush.bf16.msra.mxu0 %v915
        %1271 = vmatmul.bf16.gmra.mxu0 %v490
        %v1272 = vpop.f32.mrf.mxu0
        %v1273 = vadd.f32 %v1259, %v1272
        %v1274 = vpop.f32.mrf.mxu0
        %v1275 = vadd.f32 %v1261, %v1274
        %1276 = vdwg.mxu0
        %1277 = vmatpush.bf16.msra.mxu0 %v975
        %1278 = vmatpush.bf16.msra.mxu0 %v971
        %1279 = vmatpush.bf16.msra.mxu0 %v967
        %1280 = vmatpush.bf16.msra.mxu0 %v963
        %1281 = vmatpush.bf16.msra.mxu0 %v959
        %1282 = vmatpush.bf16.msra.mxu0 %v955
        %1283 = vmatpush.bf16.msra.mxu0 %v951
        %1284 = vmatpush.bf16.msra.mxu0 %v947
        %1285 = vmatmul.bf16.gmra.mxu0 %v491
        %v1286 = vpop.f32.mrf.mxu0
        %v1287 = vadd.f32 %v1273, %v1286
        %v1288 = vpop.f32.mrf.mxu0
        %v1289 = vadd.f32 %v1275, %v1288
        %1290 = vdwg.mxu0
        %1291 = vmatpush.bf16.msra.mxu0 %v1007
        %1292 = vmatpush.bf16.msra.mxu0 %v1003
        %1293 = vmatpush.bf16.msra.mxu0 %v999
        %1294 = vmatpush.bf16.msra.mxu0 %v995
        %1295 = vmatpush.bf16.msra.mxu0 %v991
        %1296 = vmatpush.bf16.msra.mxu0 %v987
        %1297 = vmatpush.bf16.msra.mxu0 %v983
        %1298 = vmatpush.bf16.msra.mxu0 %v979
        %1299 = vmatmul.bf16.gmra.mxu0 %v492
        %v1300 = vpop.f32.mrf.mxu0
        %v1301 = vadd.f32 %v1287, %v1300
        %v1302 = vpop.f32.mrf.mxu0
        %v1303 = vadd.f32 %v1289, %v1302
        %1304 = vdwg.mxu0
        %1305 = vmatpush.bf16.msra.mxu0 %v912
        %1306 = vmatpush.bf16.msra.mxu0 %v908
        %1307 = vmatpush.bf16.msra.mxu0 %v904
        %1308 = vmatpush.bf16.msra.mxu0 %v900
        %1309 = vmatpush.bf16.msra.mxu0 %v896
        %1310 = vmatpush.bf16.msra.mxu0 %v892
        %1311 = vmatpush.bf16.msra.mxu0 %v888
        %1312 = vmatpush.bf16.msra.mxu0 %v884
        %1313 = vmatmul.bf16.gmra.mxu0 %v489
        %v1314 = vpop.f32.mrf.mxu0
        %v1315 = vadd.f32 0.0, %v1314
        %v1316 = vpop.f32.mrf.mxu0
        %v1317 = vadd.f32 0.0, %v1316
        %1318 = vdwg.mxu0
        %1319 = vmatpush.bf16.msra.mxu0 %v944
        %1320 = vmatpush.bf16.msra.mxu0 %v940
        %1321 = vmatpush.bf16.msra.mxu0 %v936
        %1322 = vmatpush.bf16.msra.mxu0 %v932
        %1323 = vmatpush.bf16.msra.mxu0 %v928
        %1324 = vmatpush.bf16.msra.mxu0 %v924
        %1325 = vmatpush.bf16.msra.mxu0 %v920
        %1326 = vmatpush.bf16.msra.mxu0 %v916
        %1327 = vmatmul.bf16.gmra.mxu0 %v490
        %v1328 = vpop.f32.mrf.mxu0
        %v1329 = vadd.f32 %v1315, %v1328
        %v1330 = vpop.f32.mrf.mxu0
        %v1331 = vadd.f32 %v1317, %v1330
        %1332 = vdwg.mxu0
        %1333 = vmatpush.bf16.msra.mxu0 %v976
        %1334 = vmatpush.bf16.msra.mxu0 %v972
        %1335 = vmatpush.bf16.msra.mxu0 %v968
        %1336 = vmatpush.bf16.msra.mxu0 %v964
        %1337 = vmatpush.bf16.msra.mxu0 %v960
        %1338 = vmatpush.bf16.msra.mxu0 %v956
        %1339 = vmatpush.bf16.msra.mxu0 %v952
        %1340 = vmatpush.bf16.msra.mxu0 %v948
        %1341 = vmatmul.bf16.gmra.mxu0 %v491
        %v1342 = vpop.f32.mrf.mxu0
        %v1343 = vadd.f32 %v1329, %v1342
        %v1344 = vpop.f32.mrf.mxu0
        %v1345 = vadd.f32 %v1331, %v1344
        %1346 = vdwg.mxu0
        %1347 = vmatpush.bf16.msra.mxu0 %v1008
        %1348 = vmatpush.bf16.msra.mxu0 %v1004
        %1349 = vmatpush.bf16.msra.mxu0 %v1000
        %1350 = vmatpush.bf16.msra.mxu0 %v996
        %1351 = vmatpush.bf16.msra.mxu0 %v992
        %1352 = vmatpush.bf16.msra.mxu0 %v988
        %1353 = vmatpush.bf16.msra.mxu0 %v984
        %1354 = vmatpush.bf16.msra.mxu0 %v980
        %1355 = vmatmul.bf16.gmra.mxu0 %v492
        %v1356 = vpop.f32.mrf.mxu0
        %v1357 = vadd.f32 %v1343, %v1356
        %v1358 = vpop.f32.mrf.mxu0
        %v1359 = vadd.f32 %v1345, %v1358
        %1360 = vdwg.mxu0
        %p1361 = scmp.eq.s32.totalorder %s30, 0
        // Predicated region
        $region57: #{tpu_custom_call.1} parent=43 // pred_check
          %p1362 = pneg %p1361
        $region58: #{tpu_custom_call.1} parent=43 // pred_check_branch
          %1364 = sbr.rel (%p1362) target = $region60
        $region59: #{tpu_custom_call.1} parent=43 // pred_region
          %1365 = vst [vmem:[#allocation2] sm:$0xff] %v1189
          %1366 = vst [vmem:[#allocation2 + $0x8] sm:$0xff] %v1245
          %1367 = vst [vmem:[#allocation2 + $0x10] sm:$0xff] %v1301
          %1368 = vst [vmem:[#allocation2 + $0x18] sm:$0xff] %v1357
          %1369 = vst [vmem:[#allocation2 + $0x20] sm:$0xff] %v1191
          %1370 = vst [vmem:[#allocation2 + $0x28] sm:$0xff] %v1247
          %1371 = vst [vmem:[#allocation2 + $0x30] sm:$0xff] %v1303
          %1372 = vst [vmem:[#allocation2 + $0x38] sm:$0xff] %v1359
        $region60: #{tpu_custom_call.1} parent=43 // pred_fallthru
          _
        %p1373 = scmp.gt.s32.totalorder %s30, 0
        %p1374 = scmp.lt.s32.totalorder %s30, 1
        %p1375 = pnand %p1373, %p1374
        %p1376 = pneg %p1375
        // Predicated region
        $region61: #{tpu_custom_call.1} parent=43 // pred_check
          _
        $region62: #{tpu_custom_call.1} parent=43 // pred_check_branch
          %1378 = sbr.rel (%p1375) target = $region64
        $region63: #{tpu_custom_call.1} parent=43 // pred_region
          %v1379 = vld [vmem:[#allocation2] sm:$0xff]
          %v1380 = vld [vmem:[#allocation2 + $0x8] sm:$0xff]
          %v1381 = vld [vmem:[#allocation2 + $0x10] sm:$0xff]
          %v1382 = vld [vmem:[#allocation2 + $0x18] sm:$0xff]
          %v1383 = vld [vmem:[#allocation2 + $0x20] sm:$0xff]
          %v1384 = vld [vmem:[#allocation2 + $0x28] sm:$0xff]
          %v1385 = vld [vmem:[#allocation2 + $0x30] sm:$0xff]
          %v1386 = vld [vmem:[#allocation2 + $0x38] sm:$0xff]
          %v1387 = vadd.f32 %v1379, %v1189
          %v1388 = vadd.f32 %v1380, %v1245
          %v1389 = vadd.f32 %v1381, %v1301
          %v1390 = vadd.f32 %v1382, %v1357
          %v1391 = vadd.f32 %v1383, %v1191
          %v1392 = vadd.f32 %v1384, %v1247
          %v1393 = vadd.f32 %v1385, %v1303
          %v1394 = vadd.f32 %v1386, %v1359
          %1395 = vst [vmem:[#allocation2] sm:$0xff] %v1387
          %1396 = vst [vmem:[#allocation2 + $0x8] sm:$0xff] %v1388
          %1397 = vst [vmem:[#allocation2 + $0x10] sm:$0xff] %v1389
          %1398 = vst [vmem:[#allocation2 + $0x18] sm:$0xff] %v1390
          %1399 = vst [vmem:[#allocation2 + $0x20] sm:$0xff] %v1391
          %1400 = vst [vmem:[#allocation2 + $0x28] sm:$0xff] %v1392
          %1401 = vst [vmem:[#allocation2 + $0x30] sm:$0xff] %v1393
          %1402 = vst [vmem:[#allocation2 + $0x38] sm:$0xff] %v1394
        $region64: #{tpu_custom_call.1} parent=43 // pred_fallthru
          _
        %p1403 = scmp.eq.s32.totalorder %s30, 1
        // Predicated region
        $region65: #{tpu_custom_call.1} parent=43 // pred_check
          %p1404 = pneg %p1403
        $region66: #{tpu_custom_call.1} parent=43 // pred_check_branch
          %1406 = sbr.rel (%p1404) target = $region68
        $region67: #{tpu_custom_call.1} parent=43 // pred_region
          %v1407 = vld [vmem:[#allocation2] sm:$0xff]
          %v1408 = vld [vmem:[#allocation2 + $0x8] sm:$0xff]
          %v1409 = vld [vmem:[#allocation2 + $0x10] sm:$0xff]
          %v1410 = vld [vmem:[#allocation2 + $0x18] sm:$0xff]
          %v1411 = vld [vmem:[#allocation2 + $0x20] sm:$0xff]
          %v1412 = vld [vmem:[#allocation2 + $0x28] sm:$0xff]
          %v1413 = vld [vmem:[#allocation2 + $0x30] sm:$0xff]
          %v1414 = vld [vmem:[#allocation2 + $0x38] sm:$0xff]
          %v1415 = vadd.f32 %v1407, %v1189
          %v1416 = vadd.f32 %v1408, %v1245
          %v1417 = vadd.f32 %v1409, %v1301
          %v1418 = vadd.f32 %v1410, %v1357
          %v1419 = vadd.f32 %v1411, %v1191
          %v1420 = vadd.f32 %v1412, %v1247
          %v1421 = vadd.f32 %v1413, %v1303
          %v1422 = vadd.f32 %v1414, %v1359
          %v1423 = vmul.f32 %v1415, %v1415
          %v1424 = vmul.f32 %v1416, %v1416
          %v1425 = vmul.f32 %v1417, %v1417
          %v1426 = vmul.f32 %v1418, %v1418
          %v1427 = vmul.f32 %v1419, %v1419
          %v1428 = vmul.f32 %v1420, %v1420
          %v1429 = vmul.f32 %v1421, %v1421
          %v1430 = vmul.f32 %v1422, %v1422
          %v1431 = vadd.f32 %v1423, %v1424
          %v1432 = vadd.f32 %v1431, %v1425
          %v1433 = vadd.f32 %v1432, %v1426
          %1434 = vadd.xlane.f32.xlu0 %v1433
          %v1435 = vpop.xlane.xlu0 %1434
          %v1436 = vadd.f32 %v1427, %v1428
          %v1437 = vadd.f32 %v1436, %v1429
          %v1438 = vadd.f32 %v1437, %v1430
          %1439 = vadd.xlane.f32.xlu0 %v1438
          %v1440 = vpop.xlane.xlu0 %1439
          %v1441 = vrsqrt.pop %v1435
          %v1442 = vmul.f32 %v1441, %v1435
          %v1443 = vmul.f32 %v1442, %v1441
          %v1444 = vmul.f32 0.5, %v1443
          %v1445 = vsub.f32 1.5, %v1444
          %v1446 = vmul.f32 %v1441, %v1445
          %vm1447 = vweird.f32 %v1435
          %vm1448 = vweird.f32 %v1441
          %vm1449 = vmor %vm1447, %vm1448
          %v1450 = vsel %vm1449, %v1441, %v1446
          %v1451 = vrsqrt.pop %v1440
          %v1452 = vmul.f32 %v1451, %v1440
          %v1453 = vmul.f32 %v1452, %v1451
          %v1454 = vmul.f32 0.5, %v1453
          %v1455 = vsub.f32 1.5, %v1454
          %v1456 = vmul.f32 %v1451, %v1455
          %vm1457 = vweird.f32 %v1440
          %vm1458 = vweird.f32 %v1451
          %vm1459 = vmor %vm1457, %vm1458
          %v1460 = vsel %vm1459, %v1451, %v1456
          %v1461 = vmul.f32 %v1415, %v1450
          %v1462 = vmul.f32 %v1416, %v1450
          %v1463 = vmul.f32 %v1417, %v1450
          %v1464 = vmul.f32 %v1418, %v1450
          %v1465 = vmul.f32 %v1419, %v1460
          %v1466 = vmul.f32 %v1420, %v1460
          %v1467 = vmul.f32 %v1421, %v1460
          %v1468 = vmul.f32 %v1422, %v1460
          %v1469 = vpack.c.bf16 %v1465, %v1461
          %v1470 = vpack.c.bf16 %v1466, %v1462
          %v1471 = vpack.c.bf16 %v1467, %v1463
          %v1472 = vpack.c.bf16 %v1468, %v1464
          %v1473 = vld [vmem:[#allocation9] sm:$0xff]
          %v1474 = vld [vmem:[#allocation9 + $0x8] sm:$0xff]
          %v1475 = vld [vmem:[#allocation9 + $0x10] sm:$0xff]
          %v1476 = vld [vmem:[#allocation9 + $0x18] sm:$0xff]
          %v1477 = vld [vmem:[#allocation9 + $0x20] sm:$0xff]
          %v1478 = vld [vmem:[#allocation9 + $0x28] sm:$0xff]
          %v1479 = vld [vmem:[#allocation9 + $0x30] sm:$0xff]
          %v1480 = vld [vmem:[#allocation9 + $0x38] sm:$0xff]
          %v1481 = vld [vmem:[#allocation9 + $0x40] sm:$0xff]
          %v1482 = vld [vmem:[#allocation9 + $0x48] sm:$0xff]
          %v1483 = vld [vmem:[#allocation9 + $0x50] sm:$0xff]
          %v1484 = vld [vmem:[#allocation9 + $0x58] sm:$0xff]
          %v1485 = vld [vmem:[#allocation9 + $0x60] sm:$0xff]
          %v1486 = vld [vmem:[#allocation9 + $0x68] sm:$0xff]
          %v1487 = vld [vmem:[#allocation9 + $0x70] sm:$0xff]
          %v1488 = vld [vmem:[#allocation9 + $0x78] sm:$0xff]
          %v1489 = vld [vmem:[#allocation9 + $0x80] sm:$0xff]
          %v1490 = vld [vmem:[#allocation9 + $0x88] sm:$0xff]
          %v1491 = vld [vmem:[#allocation9 + $0x90] sm:$0xff]
          %v1492 = vld [vmem:[#allocation9 + $0x98] sm:$0xff]
          %v1493 = vld [vmem:[#allocation9 + $0xa0] sm:$0xff]
          %v1494 = vld [vmem:[#allocation9 + $0xa8] sm:$0xff]
          %v1495 = vld [vmem:[#allocation9 + $0xb0] sm:$0xff]
          %v1496 = vld [vmem:[#allocation9 + $0xb8] sm:$0xff]
          %v1497 = vld [vmem:[#allocation9 + $0xc0] sm:$0xff]
          %v1498 = vld [vmem:[#allocation9 + $0xc8] sm:$0xff]
          %v1499 = vld [vmem:[#allocation9 + $0xd0] sm:$0xff]
          %v1500 = vld [vmem:[#allocation9 + $0xd8] sm:$0xff]
          %v1501 = vld [vmem:[#allocation9 + $0xe0] sm:$0xff]
          %v1502 = vld [vmem:[#allocation9 + $0xe8] sm:$0xff]
          %v1503 = vld [vmem:[#allocation9 + $0xf0] sm:$0xff]
          %v1504 = vld [vmem:[#allocation9 + $0xf8] sm:$0xff]
          %v1505 = vld [vmem:[#allocation9 + $0x100] sm:$0xff]
          %v1506 = vld [vmem:[#allocation9 + $0x108] sm:$0xff]
          %v1507 = vld [vmem:[#allocation9 + $0x110] sm:$0xff]
          %v1508 = vld [vmem:[#allocation9 + $0x118] sm:$0xff]
          %v1509 = vld [vmem:[#allocation9 + $0x120] sm:$0xff]
          %v1510 = vld [vmem:[#allocation9 + $0x128] sm:$0xff]
          %v1511 = vld [vmem:[#allocation9 + $0x130] sm:$0xff]
          %v1512 = vld [vmem:[#allocation9 + $0x138] sm:$0xff]
          %v1513 = vld [vmem:[#allocation9 + $0x140] sm:$0xff]
          %v1514 = vld [vmem:[#allocation9 + $0x148] sm:$0xff]
          %v1515 = vld [vmem:[#allocation9 + $0x150] sm:$0xff]
          %v1516 = vld [vmem:[#allocation9 + $0x158] sm:$0xff]
          %v1517 = vld [vmem:[#allocation9 + $0x160] sm:$0xff]
          %v1518 = vld [vmem:[#allocation9 + $0x168] sm:$0xff]
          %v1519 = vld [vmem:[#allocation9 + $0x170] sm:$0xff]
          %v1520 = vld [vmem:[#allocation9 + $0x178] sm:$0xff]
          %v1521 = vld [vmem:[#allocation9 + $0x180] sm:$0xff]
          %v1522 = vld [vmem:[#allocation9 + $0x188] sm:$0xff]
          %v1523 = vld [vmem:[#allocation9 + $0x190] sm:$0xff]
          %v1524 = vld [vmem:[#allocation9 + $0x198] sm:$0xff]
          %v1525 = vld [vmem:[#allocation9 + $0x1a0] sm:$0xff]
          %v1526 = vld [vmem:[#allocation9 + $0x1a8] sm:$0xff]
          %v1527 = vld [vmem:[#allocation9 + $0x1b0] sm:$0xff]
          %v1528 = vld [vmem:[#allocation9 + $0x1b8] sm:$0xff]
          %v1529 = vld [vmem:[#allocation9 + $0x1c0] sm:$0xff]
          %v1530 = vld [vmem:[#allocation9 + $0x1c8] sm:$0xff]
          %v1531 = vld [vmem:[#allocation9 + $0x1d0] sm:$0xff]
          %v1532 = vld [vmem:[#allocation9 + $0x1d8] sm:$0xff]
          %v1533 = vld [vmem:[#allocation9 + $0x1e0] sm:$0xff]
          %v1534 = vld [vmem:[#allocation9 + $0x1e8] sm:$0xff]
          %v1535 = vld [vmem:[#allocation9 + $0x1f0] sm:$0xff]
          %v1536 = vld [vmem:[#allocation9 + $0x1f8] sm:$0xff]
          %v1537 = vld [vmem:[%s3] sm:$0x3]
          %v1539 = vperm.slane %v1537, 0
          %v1540 = vperm.slane %v1537, 1
          %v1607 = vunpack.c.l.b16 %v1473
          %v1608 = vunpack.c.h.b16 %v1473
          %v1609 = vunpack.c.l.b16 %v1474
          %v1610 = vunpack.c.h.b16 %v1474
          %v1611 = vunpack.c.l.b16 %v1475
          %v1612 = vunpack.c.h.b16 %v1475
          %v1613 = vunpack.c.l.b16 %v1476
          %v1614 = vunpack.c.h.b16 %v1476
          %v1615 = vunpack.c.l.b16 %v1477
          %v1616 = vunpack.c.h.b16 %v1477
          %v1617 = vunpack.c.l.b16 %v1478
          %v1618 = vunpack.c.h.b16 %v1478
          %v1619 = vunpack.c.l.b16 %v1479
          %v1620 = vunpack.c.h.b16 %v1479
          %v1621 = vunpack.c.l.b16 %v1480
          %v1622 = vunpack.c.h.b16 %v1480
          %v1623 = vunpack.c.l.b16 %v1481
          %v1624 = vunpack.c.h.b16 %v1481
          %v1625 = vunpack.c.l.b16 %v1482
          %v1626 = vunpack.c.h.b16 %v1482
          %v1627 = vunpack.c.l.b16 %v1483
          %v1628 = vunpack.c.h.b16 %v1483
          %v1629 = vunpack.c.l.b16 %v1484
          %v1630 = vunpack.c.h.b16 %v1484
          %v1631 = vunpack.c.l.b16 %v1485
          %v1632 = vunpack.c.h.b16 %v1485
          %v1633 = vunpack.c.l.b16 %v1486
          %v1634 = vunpack.c.h.b16 %v1486
          %v1635 = vunpack.c.l.b16 %v1487
          %v1636 = vunpack.c.h.b16 %v1487
          %v1637 = vunpack.c.l.b16 %v1488
          %v1638 = vunpack.c.h.b16 %v1488
          %v1639 = vunpack.c.l.b16 %v1489
          %v1640 = vunpack.c.h.b16 %v1489
          %v1641 = vunpack.c.l.b16 %v1490
          %v1642 = vunpack.c.h.b16 %v1490
          %v1643 = vunpack.c.l.b16 %v1491
          %v1644 = vunpack.c.h.b16 %v1491
          %v1645 = vunpack.c.l.b16 %v1492
          %v1646 = vunpack.c.h.b16 %v1492
          %v1647 = vunpack.c.l.b16 %v1493
          %v1648 = vunpack.c.h.b16 %v1493
          %v1649 = vunpack.c.l.b16 %v1494
          %v1650 = vunpack.c.h.b16 %v1494
          %v1651 = vunpack.c.l.b16 %v1495
          %v1652 = vunpack.c.h.b16 %v1495
          %v1653 = vunpack.c.l.b16 %v1496
          %v1654 = vunpack.c.h.b16 %v1496
          %v1655 = vunpack.c.l.b16 %v1497
          %v1656 = vunpack.c.h.b16 %v1497
          %v1657 = vunpack.c.l.b16 %v1498
          %v1658 = vunpack.c.h.b16 %v1498
          %v1659 = vunpack.c.l.b16 %v1499
          %v1660 = vunpack.c.h.b16 %v1499
          %v1661 = vunpack.c.l.b16 %v1500
          %v1662 = vunpack.c.h.b16 %v1500
          %v1663 = vunpack.c.l.b16 %v1501
          %v1664 = vunpack.c.h.b16 %v1501
          %v1665 = vunpack.c.l.b16 %v1502
          %v1666 = vunpack.c.h.b16 %v1502
          %v1667 = vunpack.c.l.b16 %v1503
          %v1668 = vunpack.c.h.b16 %v1503
          %v1669 = vunpack.c.l.b16 %v1504
          %v1670 = vunpack.c.h.b16 %v1504
          %v1671 = vunpack.c.l.b16 %v1505
          %v1672 = vunpack.c.h.b16 %v1505
          %v1673 = vunpack.c.l.b16 %v1506
          %v1674 = vunpack.c.h.b16 %v1506
          %v1675 = vunpack.c.l.b16 %v1507
          %v1676 = vunpack.c.h.b16 %v1507
          %v1677 = vunpack.c.l.b16 %v1508
          %v1678 = vunpack.c.h.b16 %v1508
          %v1679 = vunpack.c.l.b16 %v1509
          %v1680 = vunpack.c.h.b16 %v1509
          %v1681 = vunpack.c.l.b16 %v1510
          %v1682 = vunpack.c.h.b16 %v1510
          %v1683 = vunpack.c.l.b16 %v1511
          %v1684 = vunpack.c.h.b16 %v1511
          %v1685 = vunpack.c.l.b16 %v1512
          %v1686 = vunpack.c.h.b16 %v1512
          %v1687 = vunpack.c.l.b16 %v1513
          %v1688 = vunpack.c.h.b16 %v1513
          %v1689 = vunpack.c.l.b16 %v1514
          %v1690 = vunpack.c.h.b16 %v1514
          %v1691 = vunpack.c.l.b16 %v1515
          %v1692 = vunpack.c.h.b16 %v1515
          %v1693 = vunpack.c.l.b16 %v1516
          %v1694 = vunpack.c.h.b16 %v1516
          %v1695 = vunpack.c.l.b16 %v1517
          %v1696 = vunpack.c.h.b16 %v1517
          %v1697 = vunpack.c.l.b16 %v1518
          %v1698 = vunpack.c.h.b16 %v1518
          %v1699 = vunpack.c.l.b16 %v1519
          %v1700 = vunpack.c.h.b16 %v1519
          %v1701 = vunpack.c.l.b16 %v1520
          %v1702 = vunpack.c.h.b16 %v1520
          %v1703 = vunpack.c.l.b16 %v1521
          %v1704 = vunpack.c.h.b16 %v1521
          %v1705 = vunpack.c.l.b16 %v1522
          %v1706 = vunpack.c.h.b16 %v1522
          %v1707 = vunpack.c.l.b16 %v1523
          %v1708 = vunpack.c.h.b16 %v1523
          %v1709 = vunpack.c.l.b16 %v1524
          %v1710 = vunpack.c.h.b16 %v1524
          %v1711 = vunpack.c.l.b16 %v1525
          %v1712 = vunpack.c.h.b16 %v1525
          %v1713 = vunpack.c.l.b16 %v1526
          %v1714 = vunpack.c.h.b16 %v1526
          %v1715 = vunpack.c.l.b16 %v1527
          %v1716 = vunpack.c.h.b16 %v1527
          %v1717 = vunpack.c.l.b16 %v1528
          %v1718 = vunpack.c.h.b16 %v1528
          %v1719 = vunpack.c.l.b16 %v1529
          %v1720 = vunpack.c.h.b16 %v1529
          %v1721 = vunpack.c.l.b16 %v1530
          %v1722 = vunpack.c.h.b16 %v1530
          %v1723 = vunpack.c.l.b16 %v1531
          %v1724 = vunpack.c.h.b16 %v1531
          %v1725 = vunpack.c.l.b16 %v1532
          %v1726 = vunpack.c.h.b16 %v1532
          %v1727 = vunpack.c.l.b16 %v1533
          %v1728 = vunpack.c.h.b16 %v1533
          %v1729 = vunpack.c.l.b16 %v1534
          %v1730 = vunpack.c.h.b16 %v1534
          %v1731 = vunpack.c.l.b16 %v1535
          %v1732 = vunpack.c.h.b16 %v1535
          %v1733 = vunpack.c.l.b16 %v1536
          %v1734 = vunpack.c.h.b16 %v1536
          %v1735 = vpack.c.b16 %v1609, %v1607
          %v1736 = vpack.c.b16 %v1610, %v1608
          %v1737 = vpack.c.b16 %v1613, %v1611
          %v1738 = vpack.c.b16 %v1614, %v1612
          %v1739 = vpack.c.b16 %v1617, %v1615
          %v1740 = vpack.c.b16 %v1618, %v1616
          %v1741 = vpack.c.b16 %v1621, %v1619
          %v1742 = vpack.c.b16 %v1622, %v1620
          %v1743 = vpack.c.b16 %v1625, %v1623
          %v1744 = vpack.c.b16 %v1626, %v1624
          %v1745 = vpack.c.b16 %v1629, %v1627
          %v1746 = vpack.c.b16 %v1630, %v1628
          %v1747 = vpack.c.b16 %v1633, %v1631
          %v1748 = vpack.c.b16 %v1634, %v1632
          %v1749 = vpack.c.b16 %v1637, %v1635
          %v1750 = vpack.c.b16 %v1638, %v1636
          %v1751 = vpack.c.b16 %v1641, %v1639
          %v1752 = vpack.c.b16 %v1642, %v1640
          %v1753 = vpack.c.b16 %v1645, %v1643
          %v1754 = vpack.c.b16 %v1646, %v1644
          %v1755 = vpack.c.b16 %v1649, %v1647
          %v1756 = vpack.c.b16 %v1650, %v1648
          %v1757 = vpack.c.b16 %v1653, %v1651
          %v1758 = vpack.c.b16 %v1654, %v1652
          %v1759 = vpack.c.b16 %v1657, %v1655
          %v1760 = vpack.c.b16 %v1658, %v1656
          %v1761 = vpack.c.b16 %v1661, %v1659
          %v1762 = vpack.c.b16 %v1662, %v1660
          %v1763 = vpack.c.b16 %v1665, %v1663
          %v1764 = vpack.c.b16 %v1666, %v1664
          %v1765 = vpack.c.b16 %v1669, %v1667
          %v1766 = vpack.c.b16 %v1670, %v1668
          %v1767 = vpack.c.b16 %v1673, %v1671
          %v1768 = vpack.c.b16 %v1674, %v1672
          %v1769 = vpack.c.b16 %v1677, %v1675
          %v1770 = vpack.c.b16 %v1678, %v1676
          %v1771 = vpack.c.b16 %v1681, %v1679
          %v1772 = vpack.c.b16 %v1682, %v1680
          %v1773 = vpack.c.b16 %v1685, %v1683
          %v1774 = vpack.c.b16 %v1686, %v1684
          %v1775 = vpack.c.b16 %v1689, %v1687
          %v1776 = vpack.c.b16 %v1690, %v1688
          %v1777 = vpack.c.b16 %v1693, %v1691
          %v1778 = vpack.c.b16 %v1694, %v1692
          %v1779 = vpack.c.b16 %v1697, %v1695
          %v1780 = vpack.c.b16 %v1698, %v1696
          %v1781 = vpack.c.b16 %v1701, %v1699
          %v1782 = vpack.c.b16 %v1702, %v1700
          %v1783 = vpack.c.b16 %v1705, %v1703
          %v1784 = vpack.c.b16 %v1706, %v1704
          %v1785 = vpack.c.b16 %v1709, %v1707
          %v1786 = vpack.c.b16 %v1710, %v1708
          %v1787 = vpack.c.b16 %v1713, %v1711
          %v1788 = vpack.c.b16 %v1714, %v1712
          %v1789 = vpack.c.b16 %v1717, %v1715
          %v1790 = vpack.c.b16 %v1718, %v1716
          %v1791 = vpack.c.b16 %v1721, %v1719
          %v1792 = vpack.c.b16 %v1722, %v1720
          %v1793 = vpack.c.b16 %v1725, %v1723
          %v1794 = vpack.c.b16 %v1726, %v1724
          %v1795 = vpack.c.b16 %v1729, %v1727
          %v1796 = vpack.c.b16 %v1730, %v1728
          %v1797 = vpack.c.b16 %v1733, %v1731
          %v1798 = vpack.c.b16 %v1734, %v1732
          %1863 = vmatpush.bf16.msra.mxu0 %v1749
          %1864 = vmatpush.bf16.msra.mxu0 %v1747
          %1865 = vmatpush.bf16.msra.mxu0 %v1745
          %1866 = vmatpush.bf16.msra.mxu0 %v1743
          %1867 = vmatpush.bf16.msra.mxu0 %v1741
          %1868 = vmatpush.bf16.msra.mxu0 %v1739
          %1869 = vmatpush.bf16.msra.mxu0 %v1737
          %1870 = vmatpush.bf16.msra.mxu0 %v1735
          %1871 = vmatmul.bf16.gmra.mxu0 %v1469
          %v1872 = vpop.f32.mrf.mxu0
          %v1873 = vadd.f32 %v1539, %v1872
          %v1874 = vpop.f32.mrf.mxu0
          %v1875 = vadd.f32 %v1539, %v1874
          %1876 = vdwg.mxu0
          %1877 = vmatpush.bf16.msra.mxu0 %v1765
          %1878 = vmatpush.bf16.msra.mxu0 %v1763
          %1879 = vmatpush.bf16.msra.mxu0 %v1761
          %1880 = vmatpush.bf16.msra.mxu0 %v1759
          %1881 = vmatpush.bf16.msra.mxu0 %v1757
          %1882 = vmatpush.bf16.msra.mxu0 %v1755
          %1883 = vmatpush.bf16.msra.mxu0 %v1753
          %1884 = vmatpush.bf16.msra.mxu0 %v1751
          %1885 = vmatmul.bf16.gmra.mxu0 %v1470
          %v1886 = vpop.f32.mrf.mxu0
          %v1887 = vadd.f32 %v1873, %v1886
          %v1888 = vpop.f32.mrf.mxu0
          %v1889 = vadd.f32 %v1875, %v1888
          %1890 = vdwg.mxu0
          %1891 = vmatpush.bf16.msra.mxu0 %v1781
          %1892 = vmatpush.bf16.msra.mxu0 %v1779
          %1893 = vmatpush.bf16.msra.mxu0 %v1777
          %1894 = vmatpush.bf16.msra.mxu0 %v1775
          %1895 = vmatpush.bf16.msra.mxu0 %v1773
          %1896 = vmatpush.bf16.msra.mxu0 %v1771
          %1897 = vmatpush.bf16.msra.mxu0 %v1769
          %1898 = vmatpush.bf16.msra.mxu0 %v1767
          %1899 = vmatmul.bf16.gmra.mxu0 %v1471
          %v1900 = vpop.f32.mrf.mxu0
          %v1901 = vadd.f32 %v1887, %v1900
          %v1902 = vpop.f32.mrf.mxu0
          %v1903 = vadd.f32 %v1889, %v1902
          %1904 = vdwg.mxu0
          %1905 = vmatpush.bf16.msra.mxu0 %v1797
          %1906 = vmatpush.bf16.msra.mxu0 %v1795
          %1907 = vmatpush.bf16.msra.mxu0 %v1793
          %1908 = vmatpush.bf16.msra.mxu0 %v1791
          %1909 = vmatpush.bf16.msra.mxu0 %v1789
          %1910 = vmatpush.bf16.msra.mxu0 %v1787
          %1911 = vmatpush.bf16.msra.mxu0 %v1785
          %1912 = vmatpush.bf16.msra.mxu0 %v1783
          %1913 = vmatmul.bf16.gmra.mxu0 %v1472
          %v1914 = vpop.f32.mrf.mxu0
          %v1915 = vadd.f32 %v1901, %v1914
          %v1916 = vpop.f32.mrf.mxu0
          %v1917 = vadd.f32 %v1903, %v1916
          %1918 = vdwg.mxu0
          %1919 = vmatpush.bf16.msra.mxu0 %v1750
          %1920 = vmatpush.bf16.msra.mxu0 %v1748
          %1921 = vmatpush.bf16.msra.mxu0 %v1746
          %1922 = vmatpush.bf16.msra.mxu0 %v1744
          %1923 = vmatpush.bf16.msra.mxu0 %v1742
          %1924 = vmatpush.bf16.msra.mxu0 %v1740
          %1925 = vmatpush.bf16.msra.mxu0 %v1738
          %1926 = vmatpush.bf16.msra.mxu0 %v1736
          %1927 = vmatmul.bf16.gmra.mxu0 %v1469
          %v1928 = vpop.f32.mrf.mxu0
          %v1929 = vadd.f32 %v1540, %v1928
          %v1930 = vpop.f32.mrf.mxu0
          %v1931 = vadd.f32 %v1540, %v1930
          %1932 = vdwg.mxu0
          %1933 = vmatpush.bf16.msra.mxu0 %v1766
          %1934 = vmatpush.bf16.msra.mxu0 %v1764
          %1935 = vmatpush.bf16.msra.mxu0 %v1762
          %1936 = vmatpush.bf16.msra.mxu0 %v1760
          %1937 = vmatpush.bf16.msra.mxu0 %v1758
          %1938 = vmatpush.bf16.msra.mxu0 %v1756
          %1939 = vmatpush.bf16.msra.mxu0 %v1754
          %1940 = vmatpush.bf16.msra.mxu0 %v1752
          %1941 = vmatmul.bf16.gmra.mxu0 %v1470
          %v1942 = vpop.f32.mrf.mxu0
          %v1943 = vadd.f32 %v1929, %v1942
          %v1944 = vpop.f32.mrf.mxu0
          %v1945 = vadd.f32 %v1931, %v1944
          %1946 = vdwg.mxu0
          %1947 = vmatpush.bf16.msra.mxu0 %v1782
          %1948 = vmatpush.bf16.msra.mxu0 %v1780
          %1949 = vmatpush.bf16.msra.mxu0 %v1778
          %1950 = vmatpush.bf16.msra.mxu0 %v1776
          %1951 = vmatpush.bf16.msra.mxu0 %v1774
          %1952 = vmatpush.bf16.msra.mxu0 %v1772
          %1953 = vmatpush.bf16.msra.mxu0 %v1770
          %1954 = vmatpush.bf16.msra.mxu0 %v1768
          %1955 = vmatmul.bf16.gmra.mxu0 %v1471
          %v1956 = vpop.f32.mrf.mxu0
          %v1957 = vadd.f32 %v1943, %v1956
          %v1958 = vpop.f32.mrf.mxu0
          %v1959 = vadd.f32 %v1945, %v1958
          %1960 = vdwg.mxu0
          %1961 = vmatpush.bf16.msra.mxu0 %v1798
          %1962 = vmatpush.bf16.msra.mxu0 %v1796
          %1963 = vmatpush.bf16.msra.mxu0 %v1794
          %1964 = vmatpush.bf16.msra.mxu0 %v1792
          %1965 = vmatpush.bf16.msra.mxu0 %v1790
          %1966 = vmatpush.bf16.msra.mxu0 %v1788
          %1967 = vmatpush.bf16.msra.mxu0 %v1786
          %1968 = vmatpush.bf16.msra.mxu0 %v1784
          %1969 = vmatmul.bf16.gmra.mxu0 %v1472
          %v1970 = vpop.f32.mrf.mxu0
          %v1971 = vadd.f32 %v1957, %v1970
          %v1972 = vpop.f32.mrf.mxu0
          %v1973 = vadd.f32 %v1959, %v1972
          %1974 = vdwg.mxu0
          %v1975 = vmax.f32 %v1915, 0.0
          %v1976 = vmax.f32 %v1971, 0.0
          %v1977 = vmax.f32 %v1917, 0.0
          %v1978 = vmax.f32 %v1973, 0.0
          %v1979 = vld [vmem:[%s4] sm:$0x3]
          %s1980 = sld [smem:[#allocation3]]
          %v1981 = vstv %s1980
          %v1983 = vperm.slane %v1979, 0
          %v1984 = vperm.slane %v1979, 1
          %1987 = vmatpush.xpose.msra.mxu0 0.0
          %1988 = vmatpush.xpose.msra.mxu0 0.0
          %1989 = vmatpush.xpose.msra.mxu0 0.0
          %1990 = vmatpush.xpose.msra.mxu0 0.0
          %1991 = vmatpush.xpose.msra.mxu0 0.0
          %1992 = vmatpush.xpose.msra.mxu0 0.0
          %1993 = vmatpush.xpose.msra.mxu0 0.0
          %1994 = vmatpush.xpose.msra.mxu0 0.0
          %1995 = vmatpush.xpose.msra.mxu0 0.0
          %1996 = vmatpush.xpose.msra.mxu0 0.0
          %1997 = vmatpush.xpose.msra.mxu0 0.0
          %1998 = vmatpush.xpose.msra.mxu0 0.0
          %1999 = vmatpush.xpose.msra.mxu0 0.0
          %2000 = vmatpush.xpose.msra.mxu0 0.0
          %2001 = vmatpush.xpose.msra.mxu0 %v1977
          %2002 = vmatpush.xpose.msra.mxu0 %v1975
          %2003 = vmatmul.f32.gmra.mxu0 %v1983
          %v2004 = vpop.f32.mrf.mxu0
          %v2005 = vadd.f32 %v1981, %v2004
          %2006 = vdwg.mxu0
          %2007 = vmatpush.xpose.msra.mxu0 0.0
          %2008 = vmatpush.xpose.msra.mxu0 0.0
          %2009 = vmatpush.xpose.msra.mxu0 0.0
          %2010 = vmatpush.xpose.msra.mxu0 0.0
          %2011 = vmatpush.xpose.msra.mxu0 0.0
          %2012 = vmatpush.xpose.msra.mxu0 0.0
          %2013 = vmatpush.xpose.msra.mxu0 0.0
          %2014 = vmatpush.xpose.msra.mxu0 0.0
          %2015 = vmatpush.xpose.msra.mxu0 0.0
          %2016 = vmatpush.xpose.msra.mxu0 0.0
          %2017 = vmatpush.xpose.msra.mxu0 0.0
          %2018 = vmatpush.xpose.msra.mxu0 0.0
          %2019 = vmatpush.xpose.msra.mxu0 0.0
          %2020 = vmatpush.xpose.msra.mxu0 0.0
          %2021 = vmatpush.xpose.msra.mxu0 %v1978
          %2022 = vmatpush.xpose.msra.mxu0 %v1976
          %2023 = vmatmul.f32.gmra.mxu0 %v1984
          %v2024 = vpop.f32.mrf.mxu0
          %v2025 = vadd.f32 %v2005, %v2024
          %2026 = vdwg.mxu0
          %v2027 = vxor.u32 %v2025, 2147483648
          %v2028 = vmul.f32 %v2027, 1.442695
          %v2029 = vpow.pop %v2028
          %v2030 = vadd.f32 %v2029, 1.0
          %v2031 = vrcp.pop %v2030
          %v2032 = vmul.f32 %v2030, %v2031
          %v2033 = vsub.f32 1.0, %v2032
          %v2034 = vmul.f32 %v2031, %v2033
          %v2035 = vadd.f32 %v2031, %v2034
          %vm2036 = vweird.f32 %v2030
          %vm2037 = vweird.f32 %v2031
          %vm2038 = vmor %vm2036, %vm2037
          %v2039 = vsel %vm2038, %v2031, %v2035
          %v2040 = vand.u32 2147483647, %v2030
          %vm2041 = vcmp.eq.f32.partialorder %v2040, 8.507059e+37
          %v2042 = vand.u32 %v2030, 2147483648
          %v2043 = vor.u32 1.1754944e-38, %v2042
          %v2044 = vsel %vm2041, %v2043, %v2039
          %v2045 = vmul.f32 1.0, %v2044
          %vm2046 = vcmask 122880
          %2047 = vst.msk [vmem:[#allocation10] sm:$0x1] %vm2046, %v2045
        $region68: #{tpu_custom_call.1} parent=43 // pred_fallthru
          _
        // Predicated region
        $region69: #{tpu_custom_call.1} parent=43 // pred_check
          %p2048 = pneg %p193
        $region70: #{tpu_custom_call.1} parent=43 // pred_check_branch
          %2050 = sbr.rel (%p2048) target = $region72
        $region71: #{tpu_custom_call.1} parent=43 // pred_region
          %2052 = vsyncadd [#allocation6], 0
          %s2053 = scalar_lea.hbm %s6, %s29
          %s2055 = sshll.u32 [#allocation10], 4
          %s2056 = int_to_ptr.vmem [resolvable:$true] %s2055
          %s2057 = sshll.u32 %s2053, 4
          %s2058 = int_to_ptr.hbm [resolvable:$true] %s2057
          %2060 = dma.vmem_to_hbm [thread:$0]  %s2056, 16, %s2058, [#allocation6]
        $region72: #{tpu_custom_call.1} parent=43 // pred_fallthru
          _
        // Predicated region
        $region73: #{tpu_custom_call.1} parent=43 // pred_check
          %p2061 = pneg %p193
        $region74: #{tpu_custom_call.1} parent=43 // pred_check_branch
          %2063 = sbr.rel (%p2061) target = $region76
        $region75: #{tpu_custom_call.1} parent=43 // pred_region
          %2065 = dma.done [#allocation6], 16
        $region76: #{tpu_custom_call.1} parent=43 // pred_fallthru
          _
      $region44: #{tpu_custom_call.1} parent=5 // pred_fallthru
        _
      %p2066 = scmp.le.s32.totalorder 2, %s20
      // Predicated region
      $region77: #{tpu_custom_call.1} parent=5 // pred_check
        %p2067 = pneg %p2066
      $region78: #{tpu_custom_call.1} parent=5 // pred_check_branch
        %2069 = sbr.rel (%p2067) target = $region80
      $region79: #{tpu_custom_call.1} parent=5 // pred_region
        %s2070 = ssub.s32 %s20, 2
      $region80: #{tpu_custom_call.1} parent=5 // pred_fallthru
        _
    $region6: #{tpu_custom_call.1} parent=1 // loop_footer
      %s24 = sadd.s32 1, %s20
    $region7: #{tpu_custom_call.1} parent=1 // loop_footer_branch
      %19 = sbr.rel target = $region3
    $region8: #{tpu_custom_call.1} parent=1 // loop_exit
      _
    %2071 = vsyncpa [#allocation5], 1
    %s2072 = scalar_lea.sflag [#allocation5], 1
    %2073 = vsyncpa %s2072, 1
    %2074 = vsyncpa [#allocation8], 1
    %s2075 = scalar_lea.sflag [#allocation8], 1
    %2076 = vsyncpa %s2075, 1
    %2077 = vsyncpa [#allocation6], 1
    %s2078 = scalar_lea.sflag [#allocation6], 1
    %2079 = vsyncpa %s2078, 1

</llo_original>
